<compile_context>
chip_gen: v7x
topology: tpu7x:2x2x1
jax: 0.10.0
libtpu: 0.0.40
codegen_flags: <defaults>
</compile_context>

<pallas_src>
import math
import functools

import jax
import jax.numpy as jnp
from jax import lax
from jax.experimental import pallas as pl
from jax.experimental.pallas import tpu as pltpu


def _round_up(x, m):
    return (x + m - 1) // m * m


def _cdiv(a, b):
    return -(-a // b)


def _tiles(n, tm, tk):
    """Balanced row/col tiles honoring the (8, 128) rule while minimizing padding."""
    nb_r = _cdiv(n, max(tm, 8))
    tm_e = _round_up(_cdiv(n, nb_r), 8)
    np_r = tm_e * nb_r
    nb_c = _cdiv(n, max(tk, 128))
    tk_e = _round_up(_cdiv(n, nb_c), 128)
    np_c = tk_e * nb_c
    return tm_e, tk_e, np_r, np_c


def prepare_adj(adj, *, compute_dtype=jnp.float32, tm=512, tk=512):
    """Pad/cast adj once (tile layout + compute dtype) so repeated layer calls
    with the same tm/tk/compute_dtype skip the wrapper-side N^2 copy."""
    n = adj.shape[0]
    assert adj.shape == (n, n), "adj must be square (N, N)"
    _, _, np_r, np_c = _tiles(n, tm, tk)
    cdt = jnp.dtype(compute_dtype)
    out = adj
    if (np_r, np_c) != out.shape:
        out = jnp.pad(out, ((0, np_r - n), (0, np_c - n)))
    if out.dtype != cdt:
        out = out.astype(cdt)
    return out


# --------------------------------------------------------------------------
# Kernel 1: LorentzLinear  (x @ W^T + b, then Lorentz projection)
# --------------------------------------------------------------------------
def _lorentz_linear_kernel(scale_ref, x_ref, wT_ref, b_ref, mask0_ref, h_ref, *, c):
    # MXU matmul with f32 accumulation (inputs may be bf16).
    h = jnp.dot(x_ref[...], wT_ref[...], preferred_element_type=jnp.float32)
    h = h + b_ref[...]                                      # (tile, Fp)

    mask0 = mask0_ref[...]                                  # (1, Fp): 1.0 at lane 0 only
    inv0 = 1.0 - mask0
    narrow = h * inv0                                       # zero time lane BEFORE squaring
    scale_clamped = scale_ref[0, 0]                         # min(exp(scale), 10), SMEM scalar
    time = jax.nn.sigmoid(h[:, 0:1]) * scale_clamped + (math.sqrt(c) + 0.5)
    sumsq = jnp.sum(narrow * narrow, axis=-1, keepdims=True)
    s = (time * time - c) / jnp.maximum(sumsq, 1e-8)
    sqrt_s = jnp.sqrt(jnp.maximum(s, 1e-8))
    # cat([time, narrow * sqrt_s], -1)  ==  narrow*sqrt_s everywhere, time at lane 0
    h_ref[...] = (narrow * sqrt_s + time * mask0).astype(h_ref.dtype)


# --------------------------------------------------------------------------
# Kernel 2: LorentzAgg  (adj @ h_proj with Lorentz normalization epilogue)
# --------------------------------------------------------------------------
def _lorentz_normalize(sup, mask0, c):
    inv0 = 1.0 - mask0
    s0 = sup[:, 0:1]
    spatial = sup * inv0                                    # zero time lane before squaring
    rest_sq = jnp.sum(spatial * spatial, axis=-1, keepdims=True)
    denom_sq = s0 * s0 - rest_sq                            # = -<sup, sup>_Lorentz
    # out = sup / (sqrt(clamp(|denom_sq|)) / sqrt(c))  ==  sup * sqrt(c) * rsqrt(...)
    inv_denom = math.sqrt(c) * lax.rsqrt(jnp.maximum(jnp.abs(denom_sq), 1e-8))
    return sup * inv_denom


def _lorentz_agg_resident_kernel(adj_ref, h_ref, mask0_ref, out_ref, *, c):
    # h_proj fully VMEM-resident (constant block index): one matmul per row-stripe.
    sup = jnp.dot(adj_ref[...], h_ref[...], preferred_element_type=jnp.float32)
    out_ref[...] = _lorentz_normalize(sup, mask0_ref[...], c).astype(out_ref.dtype)


def _lorentz_agg_tiled_kernel(adj_ref, h_ref, mask0_ref, out_ref, *, c):
    # k reduction accumulates directly into the f32 out_ref (resident across k).
    k = pl.program_id(1)

    @pl.when(k == 0)
    def _():
        out_ref[...] = jnp.zeros_like(out_ref)

    out_ref[...] += jnp.dot(adj_ref[...], h_ref[...], preferred_element_type=jnp.float32)

    @pl.when(k == pl.num_programs(1) - 1)
    def _():
        out_ref[...] = _lorentz_normalize(out_ref[...], mask0_ref[...], c).astype(out_ref.dtype)


# --------------------------------------------------------------------------
# Wrapper
# --------------------------------------------------------------------------
def lorentz_graph_convolution(x, adj, wT, b, *, c, scale_param,
                              compute_dtype=jnp.float32,
                              tm=512, tk=512, t1=512,
                              vmem_limit_bytes=None,
                              force_path=None):
    """x: (N, Fin); adj: (N, N) dense (or already `prepare_adj`-ed);
    wT: (Fin, Fout) = W^T; b: (Fout,) or (1, Fout)."""
    # TODO(synk): torch.spmm uses a sparse adjacency; implemented as dense tiled matmul.
    N, Fin = x.shape
    Fout = wT.shape[1]
    cdt = jnp.dtype(compute_dtype)

    Fp = _round_up(Fout, 128)                # lane-dense output width (keep minimal)
    Finp = _round_up(Fin, 128)               # lane-dense MXU K for phase 1
    tm_e, tk_e, Np_r, Np_c = _tiles(N, tm, tk)

    # --- adj: reuse as-is if already prepared; otherwise pad/cast only if needed
    if adj.shape == (Np_r, Np_c) and adj.dtype == cdt:
        adj_p = adj                                          # zero-copy path
    else:
        assert adj.shape == (N, N), "adj must be (N, N) or a prepare_adj() result"
        adj_p = adj
        if (Np_r, Np_c) != (N, N):
            adj_p = jnp.pad(adj_p, ((0, Np_r - N), (0, Np_c - N)))
        if adj_p.dtype != cdt:
            adj_p = adj_p.astype(cdt)

    # small operands: pad + cast once (cheap relative to adj)
    x_p = jnp.pad(x, ((0, Np_c - N), (0, Finp - Fin))).astype(cdt)
    wT_p = jnp.pad(jnp.asarray(wT), ((0, Finp - Fin), (0, Fp - Fout))).astype(cdt)
    b_p = jnp.pad(jnp.asarray(b).reshape(1, Fout), ((0, 0), (0, Fp - Fout))).astype(jnp.float32)
    mask0 = jnp.zeros((1, Fp), jnp.float32).at[0, 0].set(1.0)
    # scale.exp().clamp_max(10): jnp so a traced scale works; read in-kernel via SMEM.
    scale_arr = jnp.minimum(jnp.exp(jnp.asarray(scale_param, jnp.float32)), 10.0).reshape(1, 1)

    # ---------------- phase 1: LorentzLinear, tiled over rows -------------
    t1_e = min(_round_up(t1, 8), Np_c)
    if Np_c % t1_e != 0:
        t1_e = tk_e                                          # tk_e always divides Np_c

    lin_kernel = functools.partial(_lorentz_linear_kernel, c=float(c))
    cost1 = pl.CostEstimate(
        flops=int(2 * Np_c * Finp * Fp),
        transcendentals=int(3 * Np_c),
        bytes_accessed=int((Np_c * Finp + Finp * Fp + Np_c * Fp) * cdt.itemsize + Fp * 8),
    )
    h_proj = pl.pallas_call(
        lin_kernel,
        out_shape=jax.ShapeDtypeStruct((Np_c, Fp), cdt),
        grid=(Np_c // t1_e,),
        in_specs=[
            pl.BlockSpec(memory_space=pltpu.MemorySpace.SMEM),   # scale scalar
            pl.BlockSpec((t1_e, Finp), lambda i: (i, 0)),        # x row block
            pl.BlockSpec((Finp, Fp), lambda i: (0, 0)),          # W^T (resident)
            pl.BlockSpec((1, Fp), lambda i: (0, 0)),             # bias
            pl.BlockSpec((1, Fp), lambda i: (0, 0)),             # lane-0 mask
        ],
        out_specs=pl.BlockSpec((t1_e, Fp), lambda i: (i, 0)),
        compiler_params=pltpu.CompilerParams(
            dimension_semantics=("parallel",),
            vmem_limit_bytes=vmem_limit_bytes),
        cost_estimate=cost1,
    )(scale_arr, x_p, wT_p, b_p, mask0)

    # ---------------- phase 2: LorentzAgg  (adj @ h_proj + normalize) -----
    itemsize = cdt.itemsize
    budget = int(0.8 * (vmem_limit_bytes if vmem_limit_bytes is not None else (16 << 20)))
    resident_bytes = (2 * Np_c * Fp * itemsize          # h_proj (conservative 2x)
                      + 2 * tm_e * Np_c * itemsize      # adj row-stripe, double-buffered
                      + 2 * tm_e * Fp * 4)              # f32 out tile, double-buffered
    use_resident = resident_bytes <= budget
    if force_path == "resident":
        use_resident = True
    elif force_path == "tiled":
        use_resident = False

    if use_resident:
        agg_kernel = functools.partial(_lorentz_agg_resident_kernel, c=float(c))
        cost2 = pl.CostEstimate(
            flops=int(2 * Np_r * Np_c * Fp),
            transcendentals=int(Np_r),
            bytes_accessed=int(Np_r * Np_c * itemsize + Np_c * Fp * itemsize + Np_r * Fp * 4),
        )
        out_p = pl.pallas_call(
            agg_kernel,
            out_shape=jax.ShapeDtypeStruct((Np_r, Fp), jnp.float32),
            grid=(Np_r // tm_e,),
            in_specs=[
                pl.BlockSpec((tm_e, Np_c), lambda i: (i, 0)),    # adj row-stripe
                pl.BlockSpec((Np_c, Fp), lambda i: (0, 0)),      # h_proj, DMA'd once
                pl.BlockSpec((1, Fp), lambda i: (0, 0)),
            ],
            out_specs=pl.BlockSpec((tm_e, Fp), lambda i: (i, 0)),
            compiler_params=pltpu.CompilerParams(
                dimension_semantics=("parallel",),
                vmem_limit_bytes=vmem_limit_bytes),
            cost_estimate=cost2,
        )(adj_p, h_proj, mask0)
    else:
        agg_kernel = functools.partial(_lorentz_agg_tiled_kernel, c=float(c))
        cost2 = pl.CostEstimate(
            flops=int(2 * Np_r * Np_c * Fp),
            transcendentals=int(Np_r),
            bytes_accessed=int(Np_r * Np_c * itemsize
                               + (Np_r // tm_e) * Np_c * Fp * itemsize
                               + Np_r * Fp * 4),
        )
        out_p = pl.pallas_call(
            agg_kernel,
            out_shape=jax.ShapeDtypeStruct((Np_r, Fp), jnp.float32),
            grid=(Np_r // tm_e, Np_c // tk_e),
            in_specs=[
                pl.BlockSpec((tm_e, tk_e), lambda i, k: (i, k)),
                pl.BlockSpec((tk_e, Fp), lambda i, k: (k, 0)),
                pl.BlockSpec((1, Fp), lambda i, k: (0, 0)),
            ],
            out_specs=pl.BlockSpec((tm_e, Fp), lambda i, k: (i, 0)),
            compiler_params=pltpu.CompilerParams(
                dimension_semantics=("parallel", "arbitrary"),
                vmem_limit_bytes=vmem_limit_bytes),
            cost_estimate=cost2,
        )(adj_p, h_proj, mask0)

    out = out_p[:N, :Fout]
    return out, adj                                          # module returns (h, adj)


# --------------------------------------------------------------------------
# Pure-JAX reference mirroring the PyTorch forward (eval mode).
# --------------------------------------------------------------------------
def _reference(x, adj, wT, b, *, c, scale_param, compute_dtype=jnp.float32):
    cdt = jnp.dtype(compute_dtype)
    b = jnp.asarray(b).reshape(1, -1)
    h = jnp.dot(x.astype(cdt), wT.astype(cdt), preferred_element_type=jnp.float32) + b
    scale_clamped = jnp.minimum(jnp.exp(jnp.asarray(scale_param, jnp.float32)), 10.0)
    time = jax.nn.sigmoid(h[:, 0:1]) * scale_clamped + (math.sqrt(c) + 0.5)
    narrow = h[:, 1:]
    s = (time * time - c) / jnp.maximum(jnp.sum(narrow * narrow, -1, keepdims=True), 1e-8)
    hp = jnp.concatenate([time, narrow * jnp.sqrt(jnp.maximum(s, 1e-8))], axis=-1).astype(cdt)
    sup = jnp.dot(adj.astype(cdt), hp, preferred_element_type=jnp.float32)
    denom_sq = sup[:, 0:1] ** 2 - jnp.sum(sup[:, 1:] ** 2, -1, keepdims=True)
    return sup * (math.sqrt(c) * lax.rsqrt(jnp.maximum(jnp.abs(denom_sq), 1e-8)))


if __name__ == "__main__":
    c = 1.0
    scale_param = math.log(10.0)
    key = jax.random.PRNGKey(0)

    def make_inputs(k, N, Fin, Fout):
        kx, kw, ka = jax.random.split(k, 3)
        x = jax.random.normal(kx, (N, Fin), dtype=jnp.float32)
        # nn.Linear(Fin, Fout): weight (Fout, Fin) uniform(-stdv, stdv), stdv=1/sqrt(Fout),
        # then column 0 zeroed (reset_parameters); bias = 0.
        stdv = 1.0 / math.sqrt(Fout)
        W = jax.random.uniform(kw, (Fout, Fin), minval=-stdv, maxval=stdv, dtype=jnp.float32)
        W = W.at[:, 0].set(0.0)
        wT = W.T
        b = jnp.zeros((Fout,), dtype=jnp.float32)
        # dense, row-normalized adjacency with self-loops
        A = (jax.random.uniform(ka, (N, N)) < 0.1).astype(jnp.float32) + jnp.eye(N, dtype=jnp.float32)
        adj = A / jnp.sum(A, axis=1, keepdims=True)
        return x, adj, wT, b

    k1, k2 = jax.random.split(key)

    # --- main test: f32, auto path (small -> h_proj-resident, no adj copy made)
    x, adj, wT, b = make_inputs(k1, N=384, Fin=64, Fout=48)
    ref = _reference(x, adj, wT, b, c=c, scale_param=scale_param)
    out, adj_out = lorentz_graph_convolution(
        x, adj, wT, b, c=c, scale_param=scale_param,
        compute_dtype=jnp.float32, tm=128, tk=128)
    out = jax.block_until_ready(out)
    assert out.shape == (384, 48)
    assert jnp.allclose(out, ref, atol=1e-4, rtol=1e-4), "f32 resident kernel mismatch"

    # --- same inputs, forced tiled reduction path (3x3 grid, out_ref accumulation)
    out_t, _ = lorentz_graph_convolution(
        x, adj, wT, b, c=c, scale_param=scale_param,
        compute_dtype=jnp.float32, tm=128, tk=128, force_path="tiled")
    out_t = jax.block_until_ready(out_t)
    assert jnp.allclose(out_t, ref, atol=1e-4, rtol=1e-4), "f32 tiled kernel mismatch"

    # --- bf16 adj/h_proj stream with a pre-prepared (cast once, reusable) adj
    adj_bf = prepare_adj(adj, compute_dtype=jnp.bfloat16, tm=128, tk=128)
    out_bf, _ = lorentz_graph_convolution(
        x, adj_bf, wT, b, c=c, scale_param=scale_param,
        compute_dtype=jnp.bfloat16, tm=128, tk=128, force_path="tiled")
    out_bf = jax.block_until_ready(out_bf)
    ref_bf = _reference(x, adj, wT, b, c=c, scale_param=scale_param, compute_dtype=jnp.bfloat16)
    assert jnp.allclose(out_bf, ref_bf, atol=1e-3, rtol=1e-3), "bf16 kernel mismatch vs bf16 reference"

    # --- padding path: N not a multiple of any tile, Fout << 128, Fin << 128
    x2, adj2, wT2, b2 = make_inputs(k2, N=20, Fin=16, Fout=8)
    ref2 = _reference(x2, adj2, wT2, b2, c=c, scale_param=scale_param)
    out2, _ = lorentz_graph_convolution(x2, adj2, wT2, b2, c=c, scale_param=scale_param)
    out2 = jax.block_until_ready(out2)
    assert out2.shape == (20, 8)
    assert jnp.allclose(out2, ref2, atol=1e-4, rtol=1e-4), "padded kernel mismatch vs reference"

    # --- prepared-adj reuse path (caller pads/casts once; wrapper makes no copy)
    adj2_prep = prepare_adj(adj2)    # default tm/tk/compute_dtype match the call above
    out3, _ = lorentz_graph_convolution(x2, adj2_prep, wT2, b2, c=c, scale_param=scale_param)
    out3 = jax.block_until_ready(out3)
    assert jnp.allclose(out3, out2, atol=1e-6, rtol=1e-6), "prepared-adj path mismatch"

    print("KERNEL_OK")
</pallas_src>

<mosaic_0001>
module attributes {stable_mosaic.version = 11 : i64} {
  func.func @_lorentz_linear_kernel(%arg0: i32, %arg1: memref<1x1xf32, #tpu.memory_space<smem>>, %arg2: memref<384x128xf32, #tpu.memory_space<vmem>>, %arg3: memref<128x128xf32, #tpu.memory_space<vmem>>, %arg4: memref<1x128xf32, #tpu.memory_space<vmem>>, %arg5: memref<1x128xf32, #tpu.memory_space<vmem>>, %arg6: memref<384x128xf32, #tpu.memory_space<vmem>>) attributes {dimension_semantics = [#tpu.dimension_semantics<parallel>], iteration_bounds = array<i64: 1>, scalar_prefetch = 0 : i64, scratch_operands = 0 : i64, tpu.core_type = #tpu.core_type<tc>, window_params = [{transform_indices = @transform_0, window_bounds = array<i64: 1, 1>}, {transform_indices = @transform_1, window_bounds = array<i64: 384, 128>}, {pipeline_mode = #tpu.pipeline_mode<synchronous>, transform_indices = @transform_2, window_bounds = array<i64: 128, 128>}, {pipeline_mode = #tpu.pipeline_mode<synchronous>, transform_indices = @transform_3, window_bounds = array<i64: 1, 128>}, {pipeline_mode = #tpu.pipeline_mode<synchronous>, transform_indices = @transform_4, window_bounds = array<i64: 1, 128>}, {transform_indices = @transform_5, window_bounds = array<i64: 384, 128>}]} {
    %c0 = arith.constant 0 : index
    %c0_0 = arith.constant 0 : index
    %0 = vector.load %arg2[%c0, %c0_0] : memref<384x128xf32, #tpu.memory_space<vmem>>, vector<384x128xf32>
    %c0_1 = arith.constant 0 : index
    %c0_2 = arith.constant 0 : index
    %1 = vector.load %arg3[%c0_1, %c0_2] : memref<128x128xf32, #tpu.memory_space<vmem>>, vector<128x128xf32>
    %cst = arith.constant dense<0.000000e+00> : vector<384x128xf32>
    %2 = tpu.matmul %0, %1, %cst {dimension_numbers = #tpu.dot_dimension_numbers<[1], [0], [0], [1], [0, 0, 1, 1], [], []>} : vector<384x128xf32>, vector<128x128xf32>, vector<384x128xf32> -> vector<384x128xf32>
    %c0_3 = arith.constant 0 : index
    %c0_4 = arith.constant 0 : index
    %3 = vector.load %arg4[%c0_3, %c0_4] : memref<1x128xf32, #tpu.memory_space<vmem>>, vector<1x128xf32>
    %4 = vector.broadcast %3 : vector<1x128xf32> to vector<384x128xf32>
    %5 = arith.addf %2, %4 : vector<384x128xf32>
    %c0_5 = arith.constant 0 : index
    %c0_6 = arith.constant 0 : index
    %6 = vector.load %arg5[%c0_5, %c0_6] : memref<1x128xf32, #tpu.memory_space<vmem>>, vector<1x128xf32>
    %cst_7 = arith.constant 1.000000e+00 : f32
    %7 = vector.broadcast %cst_7 : f32 to vector<1x128xf32>
    %8 = arith.subf %7, %6 : vector<1x128xf32>
    %9 = vector.broadcast %8 : vector<1x128xf32> to vector<384x128xf32>
    %10 = arith.mulf %5, %9 : vector<384x128xf32>
    %c0_8 = arith.constant 0 : index
    %c0_9 = arith.constant 0 : index
    %11 = memref.load %arg1[%c0_8, %c0_9] : memref<1x1xf32, #tpu.memory_space<smem>>
    %12 = vector.extract_strided_slice %5 {offsets = [0, 0], sizes = [384, 1], strides = [1, 1]} : vector<384x128xf32> to vector<384x1xf32>
    %13 = arith.negf %12 : vector<384x1xf32>
    %14 = math.exp %13 : vector<384x1xf32>
    %cst_10 = arith.constant 1.000000e+00 : f32
    %15 = vector.broadcast %cst_10 : f32 to vector<384x1xf32>
    %16 = arith.addf %15, %14 : vector<384x1xf32>
    %17 = arith.divf %15, %16 : vector<384x1xf32>
    %18 = vector.broadcast %11 : f32 to vector<384x1xf32>
    %19 = arith.mulf %17, %18 : vector<384x1xf32>
    %cst_11 = arith.constant 1.500000e+00 : f32
    %20 = vector.broadcast %cst_11 : f32 to vector<384x1xf32>
    %21 = arith.addf %19, %20 : vector<384x1xf32>
    %22 = arith.mulf %10, %10 : vector<384x128xf32>
    %cst_12 = arith.constant dense<0.000000e+00> : vector<384xf32>
    %23 = vector.multi_reduction <add>, %22, %cst_12 [1] : vector<384x128xf32> to vector<384xf32>
    %24 = vector.shape_cast %23 : vector<384xf32> to vector<384x1xf32>
    %25 = arith.mulf %21, %21 : vector<384x1xf32>
    %cst_13 = arith.constant 1.000000e+00 : f32
    %26 = vector.broadcast %cst_13 : f32 to vector<384x1xf32>
    %27 = arith.subf %25, %26 : vector<384x1xf32>
    %cst_14 = arith.constant 9.99999993E-9 : f32
    %28 = vector.broadcast %cst_14 : f32 to vector<384x1xf32>
    %29 = arith.maximumf %24, %28 : vector<384x1xf32>
    %30 = arith.divf %27, %29 : vector<384x1xf32>
    %cst_15 = arith.constant 9.99999993E-9 : f32
    %31 = vector.broadcast %cst_15 : f32 to vector<384x1xf32>
    %32 = arith.maximumf %30, %31 : vector<384x1xf32>
    %33 = math.sqrt %32 : vector<384x1xf32>
    %34 = vector.broadcast %33 : vector<384x1xf32> to vector<384x128xf32>
    %35 = arith.mulf %10, %34 : vector<384x128xf32>
    %36 = vector.broadcast %21 : vector<384x1xf32> to vector<384x128xf32>
    %37 = vector.broadcast %6 : vector<1x128xf32> to vector<384x128xf32>
    %38 = arith.mulf %36, %37 : vector<384x128xf32>
    %39 = arith.addf %35, %38 : vector<384x128xf32>
    %c0_16 = arith.constant 0 : index
    %c0_17 = arith.constant 0 : index
    %40 = vector.load %arg6[%c0_16, %c0_17] : memref<384x128xf32, #tpu.memory_space<vmem>>, vector<384x128xf32>
    tpu.vector_store %arg6[%c0_16, %c0_17], %39 {strides = array<i32>} : memref<384x128xf32, #tpu.memory_space<vmem>>, vector<384x128xf32>,
    return
  }
  func.func @transform_0(%arg0: i32) -> (i32, i32) {
    %c0_i32 = arith.constant 0 : i32
    %c0_i32_0 = arith.constant 0 : i32
    %c0_i32_1 = arith.constant 0 : i32
    return %c0_i32, %c0_i32_0 : i32, i32
  }
  func.func @transform_1(%arg0: i32) -> (i32, i32) {
    %c0_i32 = arith.constant 0 : i32
    %c0_i32_0 = arith.constant 0 : i32
    return %arg0, %c0_i32 : i32, i32
  }
  func.func @transform_2(%arg0: i32) -> (i32, i32) {
    %c0_i32 = arith.constant 0 : i32
    %c0_i32_0 = arith.constant 0 : i32
    %c0_i32_1 = arith.constant 0 : i32
    return %c0_i32, %c0_i32_0 : i32, i32
  }
  func.func @transform_3(%arg0: i32) -> (i32, i32) {
    %c0_i32 = arith.constant 0 : i32
    %c0_i32_0 = arith.constant 0 : i32
    %c0_i32_1 = arith.constant 0 : i32
    return %c0_i32, %c0_i32_0 : i32, i32
  }
  func.func @transform_4(%arg0: i32) -> (i32, i32) {
    %c0_i32 = arith.constant 0 : i32
    %c0_i32_0 = arith.constant 0 : i32
    %c0_i32_1 = arith.constant 0 : i32
    return %c0_i32, %c0_i32_0 : i32, i32
  }
  func.func @transform_5(%arg0: i32) -> (i32, i32) {
    %c0_i32 = arith.constant 0 : i32
    %c0_i32_0 = arith.constant 0 : i32
    return %arg0, %c0_i32 : i32, i32
  }
}

</mosaic_0001>

<llo_original>
// kernel: tpu_custom_call.1
$region0: #{tpu_custom_call.1}
  #allocation0 [shape = 'u32[]', space=smem, size = 0x4, offset = 0x4, fixed_abs, tag = 'smem constant byte address 0x4 - core index']
  #allocation1 [shape = 'u32[144,128]{1,0:T(1,128)}', space=vmem, size = 0x12000, scoped, tag = 'internal scratch']
  #allocation2 [shape = 'f32[1,1]{1,0:T(1,128)S(6)}', space=smem, size = 0x200, scoped, tag = 'scoped memory for tpu_custom_call.1']
  %s0 = inlined_call_operand.<no memory space> [shape: f32[1,1], index: 0, kind: input, shape index: {}]
  %s1 = inlined_call_operand.hbm [shape: f32[384,128], index: 1, kind: input, shape index: {}]
  %s2 = inlined_call_operand.hbm [shape: f32[128,128], index: 2, kind: input, shape index: {}]
  %s3 = inlined_call_operand.vmem [shape: f32[1,128], index: 3, kind: input, shape index: {}]
  %s4 = inlined_call_operand.vmem [shape: f32[1,128], index: 4, kind: input, shape index: {}]
  %s5 = inlined_call_operand.hbm [shape: f32[384,128], index: 5, kind: output, shape index: {}]
  %s6 = sld [smem:[#allocation0]]
  $region38: #{tpu_custom_call.1} parent=0
    _
  %s8 = ssub.s32 1, %s6
  %s9 = scalar_select 0, %s8, %s6
  %10 = sst [smem:[#allocation2]] %s0
  $region1: #{tpu_custom_call.1} parent=0
    #allocation3 [shape = 'u8[196608]{0}', space=vmem, size = 0x30000, scoped, tag = 'input window, operand 1, single buffered']
    #allocation4 [shape = 's32[1]{0}', space=sflag, size = 0x4, scoped, tag = 'scoped memory for tpu_custom_call.1']
    #allocation5 [shape = 's32[1]{0}', space=sflag, size = 0x4, scoped, tag = 'scoped memory for tpu_custom_call.1']
    #allocation6 [shape = 'u8[65536]{0}', space=vmem, size = 0x10000, scoped, tag = 'input window, operand 2, single buffered']
    #allocation7 [shape = 's32[1]{0}', space=sflag, size = 0x4, scoped, tag = 'scoped memory for tpu_custom_call.1']
    #allocation8 [shape = 'u8[196608]{0}', space=vmem, size = 0x30000, scoped, tag = 'output window, operand 0, single buffered']
    %11 = vsyncpa [#allocation4], 0
    %12 = vsyncpa [#allocation7], 0
    %13 = vsyncpa [#allocation5], 0
    // Predicated region
    $region2: #{tpu_custom_call.1} parent=1 // pred_check
      _
    $region3: #{tpu_custom_call.1} parent=1 // pred_check_branch
      %15 = sbr.rel (0) target = $region5
    $region4: #{tpu_custom_call.1} parent=1 // pred_region
      _
    $region5: #{tpu_custom_call.1} parent=1 // pred_fallthru
      _
    // Predicated region
    $region6: #{tpu_custom_call.1} parent=1 // pred_check
      _
    $region7: #{tpu_custom_call.1} parent=1 // pred_check_branch
      %17 = sbr.rel (0) target = $region9
    $region8: #{tpu_custom_call.1} parent=1 // pred_region
      %s19 = ssub.s32 6144, 6144
      %20 = vsyncadd [#allocation4], %s19
      %s21 = sshll.u32 [#allocation3], 4
      %s22 = int_to_ptr.vmem [resolvable:$true] %s21
      %27 = dma.hbm_to_vmem [thread:$0]  %s1, 6144, %s22, [#allocation4], 128, 128, 8
    $region9: #{tpu_custom_call.1} parent=1 // pred_fallthru
      _
    // Predicated region
    $region10: #{tpu_custom_call.1} parent=1 // pred_check
      _
    $region11: #{tpu_custom_call.1} parent=1 // pred_check_branch
      %29 = sbr.rel (0) target = $region13
    $region12: #{tpu_custom_call.1} parent=1 // pred_region
      %s31 = ssub.s32 2048, 2048
      %32 = vsyncadd [#allocation7], %s31
      %s33 = sshll.u32 [#allocation6], 4
      %s34 = int_to_ptr.vmem [resolvable:$true] %s33
      %39 = dma.hbm_to_vmem [thread:$0]  %s2, 2048, %s34, [#allocation7], 128, 128, 8
    $region13: #{tpu_custom_call.1} parent=1 // pred_fallthru
      _
    // Predicated region
    $region14: #{tpu_custom_call.1} parent=1 // pred_check
      _
    $region15: #{tpu_custom_call.1} parent=1 // pred_check_branch
      %41 = sbr.rel (0) target = $region17
    $region16: #{tpu_custom_call.1} parent=1 // pred_region
      _
    $region17: #{tpu_custom_call.1} parent=1 // pred_fallthru
      _
    // Predicated region
    $region18: #{tpu_custom_call.1} parent=1 // pred_check
      _
    $region19: #{tpu_custom_call.1} parent=1 // pred_check_branch
      %43 = sbr.rel (0) target = $region21
    $region20: #{tpu_custom_call.1} parent=1 // pred_region
      _
    $region21: #{tpu_custom_call.1} parent=1 // pred_fallthru
      _
    // Predicated region
    $region22: #{tpu_custom_call.1} parent=1 // pred_check
      _
    $region23: #{tpu_custom_call.1} parent=1 // pred_check_branch
      %45 = sbr.rel (0) target = $region25
    $region24: #{tpu_custom_call.1} parent=1 // pred_region
      %46 = dma.done [#allocation4], 6144
    $region25: #{tpu_custom_call.1} parent=1 // pred_fallthru
      _
    // Predicated region
    $region26: #{tpu_custom_call.1} parent=1 // pred_check
      _
    $region27: #{tpu_custom_call.1} parent=1 // pred_check_branch
      %48 = sbr.rel (0) target = $region29
    $region28: #{tpu_custom_call.1} parent=1 // pred_region
      %49 = dma.done [#allocation7], 2048
    $region29: #{tpu_custom_call.1} parent=1 // pred_fallthru
      _
    %v50 = vld [vmem:[#allocation3] sm:$0xff]
    %v51 = vld [vmem:[#allocation3 + $0x8] sm:$0xff]
    %v52 = vld [vmem:[#allocation3 + $0x10] sm:$0xff]
    %v53 = vld [vmem:[#allocation3 + $0x18] sm:$0xff]
    %v54 = vld [vmem:[#allocation3 + $0x20] sm:$0xff]
    %v55 = vld [vmem:[#allocation3 + $0x28] sm:$0xff]
    %v56 = vld [vmem:[#allocation3 + $0x30] sm:$0xff]
    %v57 = vld [vmem:[#allocation3 + $0x38] sm:$0xff]
    %v58 = vld [vmem:[#allocation3 + $0x40] sm:$0xff]
    %v59 = vld [vmem:[#allocation3 + $0x48] sm:$0xff]
    %v60 = vld [vmem:[#allocation3 + $0x50] sm:$0xff]
    %v61 = vld [vmem:[#allocation3 + $0x58] sm:$0xff]
    %v62 = vld [vmem:[#allocation3 + $0x60] sm:$0xff]
    %v63 = vld [vmem:[#allocation3 + $0x68] sm:$0xff]
    %v64 = vld [vmem:[#allocation3 + $0x70] sm:$0xff]
    %v65 = vld [vmem:[#allocation3 + $0x78] sm:$0xff]
    %v66 = vld [vmem:[#allocation3 + $0x80] sm:$0xff]
    %v67 = vld [vmem:[#allocation3 + $0x88] sm:$0xff]
    %v68 = vld [vmem:[#allocation3 + $0x90] sm:$0xff]
    %v69 = vld [vmem:[#allocation3 + $0x98] sm:$0xff]
    %v70 = vld [vmem:[#allocation3 + $0xa0] sm:$0xff]
    %v71 = vld [vmem:[#allocation3 + $0xa8] sm:$0xff]
    %v72 = vld [vmem:[#allocation3 + $0xb0] sm:$0xff]
    %v73 = vld [vmem:[#allocation3 + $0xb8] sm:$0xff]
    %v74 = vld [vmem:[#allocation3 + $0xc0] sm:$0xff]
    %v75 = vld [vmem:[#allocation3 + $0xc8] sm:$0xff]
    %v76 = vld [vmem:[#allocation3 + $0xd0] sm:$0xff]
    %v77 = vld [vmem:[#allocation3 + $0xd8] sm:$0xff]
    %v78 = vld [vmem:[#allocation3 + $0xe0] sm:$0xff]
    %v79 = vld [vmem:[#allocation3 + $0xe8] sm:$0xff]
    %v80 = vld [vmem:[#allocation3 + $0xf0] sm:$0xff]
    %v81 = vld [vmem:[#allocation3 + $0xf8] sm:$0xff]
    %v82 = vld [vmem:[#allocation3 + $0x100] sm:$0xff]
    %v83 = vld [vmem:[#allocation3 + $0x108] sm:$0xff]
    %v84 = vld [vmem:[#allocation3 + $0x110] sm:$0xff]
    %v85 = vld [vmem:[#allocation3 + $0x118] sm:$0xff]
    %v86 = vld [vmem:[#allocation3 + $0x120] sm:$0xff]
    %v87 = vld [vmem:[#allocation3 + $0x128] sm:$0xff]
    %v88 = vld [vmem:[#allocation3 + $0x130] sm:$0xff]
    %v89 = vld [vmem:[#allocation3 + $0x138] sm:$0xff]
    %v90 = vld [vmem:[#allocation3 + $0x140] sm:$0xff]
    %v91 = vld [vmem:[#allocation3 + $0x148] sm:$0xff]
    %v92 = vld [vmem:[#allocation3 + $0x150] sm:$0xff]
    %v93 = vld [vmem:[#allocation3 + $0x158] sm:$0xff]
    %v94 = vld [vmem:[#allocation3 + $0x160] sm:$0xff]
    %v95 = vld [vmem:[#allocation3 + $0x168] sm:$0xff]
    %v96 = vld [vmem:[#allocation3 + $0x170] sm:$0xff]
    %v97 = vld [vmem:[#allocation3 + $0x178] sm:$0xff]
    %v98 = vld [vmem:[#allocation6] sm:$0xff]
    %v99 = vld [vmem:[#allocation6 + $0x8] sm:$0xff]
    %v100 = vld [vmem:[#allocation6 + $0x10] sm:$0xff]
    %v101 = vld [vmem:[#allocation6 + $0x18] sm:$0xff]
    %v102 = vld [vmem:[#allocation6 + $0x20] sm:$0xff]
    %v103 = vld [vmem:[#allocation6 + $0x28] sm:$0xff]
    %v104 = vld [vmem:[#allocation6 + $0x30] sm:$0xff]
    %v105 = vld [vmem:[#allocation6 + $0x38] sm:$0xff]
    %v106 = vld [vmem:[#allocation6 + $0x40] sm:$0xff]
    %v107 = vld [vmem:[#allocation6 + $0x48] sm:$0xff]
    %v108 = vld [vmem:[#allocation6 + $0x50] sm:$0xff]
    %v109 = vld [vmem:[#allocation6 + $0x58] sm:$0xff]
    %v110 = vld [vmem:[#allocation6 + $0x60] sm:$0xff]
    %v111 = vld [vmem:[#allocation6 + $0x68] sm:$0xff]
    %v112 = vld [vmem:[#allocation6 + $0x70] sm:$0xff]
    %v113 = vld [vmem:[#allocation6 + $0x78] sm:$0xff]
    %v114 = vld [vmem:[%s3] sm:$0x1]
    %v116 = vlaneseq
    %v117 = vshrl.u32 %v116, 7
    %v118 = vsub.s32 0, %v117
    %v119 = vrot.slane %v114, %v118
    %121 = vmatprep.subr.mxu0 0.0
    %122 = vmatpush1.msra.mxu0 %v98
    %123 = vmatprep.subr.mxu0 0.0
    %124 = vmatpush1.msra.mxu0 %v99
    %125 = vmatprep.subr.mxu0 0.0
    %126 = vmatpush1.msra.mxu0 %v100
    %127 = vmatprep.subr.mxu0 0.0
    %128 = vmatpush1.msra.mxu0 %v101
    %129 = vmatprep.subr.mxu0 0.0
    %130 = vmatpush1.msra.mxu0 %v102
    %131 = vmatprep.subr.mxu0 0.0
    %132 = vmatpush1.msra.mxu0 %v103
    %133 = vmatprep.subr.mxu0 0.0
    %134 = vmatpush1.msra.mxu0 %v104
    %135 = vmatprep.subr.mxu0 0.0
    %136 = vmatpush1.msra.mxu0 %v105
    %137 = vmatprep.subr.mxu0 0.0
    %138 = vmatpush1.msra.mxu0 %v106
    %139 = vmatprep.subr.mxu0 0.0
    %140 = vmatpush1.msra.mxu0 %v107
    %141 = vmatprep.subr.mxu0 0.0
    %142 = vmatpush1.msra.mxu0 %v108
    %143 = vmatprep.subr.mxu0 0.0
    %144 = vmatpush1.msra.mxu0 %v109
    %145 = vmatprep.subr.mxu0 0.0
    %146 = vmatpush1.msra.mxu0 %v110
    %147 = vmatprep.subr.mxu0 0.0
    %148 = vmatpush1.msra.mxu0 %v111
    %149 = vmatprep.subr.mxu0 0.0
    %150 = vmatpush1.msra.mxu0 %v112
    %151 = vmatprep.subr.mxu0 0.0
    %152 = vmatpush1.msra.mxu0 %v113
    %153 = vmatprep.subr.mxu0 0.0
    %154 = vmatpush1.msra.mxu0 0.0
    %155 = vmatprep.subr.mxu0 0.0
    %156 = vmatpush1.msra.mxu0 0.0
    %157 = vmatprep.subr.mxu0 0.0
    %158 = vmatpush1.msra.mxu0 0.0
    %159 = vmatprep.subr.mxu0 0.0
    %160 = vmatpush1.msra.mxu0 0.0
    %161 = vmatprep.subr.mxu0 0.0
    %162 = vmatpush1.msra.mxu0 0.0
    %163 = vmatprep.subr.mxu0 0.0
    %164 = vmatpush1.msra.mxu0 0.0
    %165 = vmatprep.subr.mxu0 0.0
    %166 = vmatpush1.msra.mxu0 0.0
    %167 = vmatprep.subr.mxu0 0.0
    %168 = vmatpush1.msra.mxu0 0.0
    %169 = vmatprep.subr.mxu0 0.0
    %170 = vmatpush1.msra.mxu0 0.0
    %171 = vmatprep.subr.mxu0 0.0
    %172 = vmatpush1.msra.mxu0 0.0
    %173 = vmatprep.subr.mxu0 0.0
    %174 = vmatpush1.msra.mxu0 0.0
    %175 = vmatprep.subr.mxu0 0.0
    %176 = vmatpush1.msra.mxu0 0.0
    %177 = vmatprep.subr.mxu0 0.0
    %178 = vmatpush1.msra.mxu0 0.0
    %179 = vmatprep.subr.mxu0 0.0
    %180 = vmatpush1.msra.mxu0 0.0
    %181 = vmatprep.subr.mxu0 0.0
    %182 = vmatpush1.msra.mxu0 0.0
    %183 = vmatprep.subr.mxu0 0.0
    %184 = vmatpush1.msra.mxu0 0.0
    %185 = vmatprep.mubr.f32.mxu0 0.0
    %186 = vmatmul.mubr.f32.gmra.mrb[0].mxu0 %v50
    %v187 = vpop.f32.mrb[0].mxu0
    %v188 = vadd.f32 %v119, %v187
    %v189 = vpop.f32.mrb[0].mxu0
    %190 = vmatprep.mubr.f32.mxu0 0.0
    %191 = vmatmul.mubr.f32.gmra.mrb[0].mxu0 %v51
    %v192 = vpop.f32.mrb[0].mxu0
    %v193 = vadd.f32 %v119, %v192
    %v194 = vpop.f32.mrb[0].mxu0
    %195 = vmatprep.mubr.f32.mxu0 0.0
    %196 = vmatmul.mubr.f32.gmra.mrb[0].mxu0 %v52
    %v197 = vpop.f32.mrb[0].mxu0
    %v198 = vadd.f32 %v119, %v197
    %v199 = vpop.f32.mrb[0].mxu0
    %200 = vmatprep.mubr.f32.mxu0 0.0
    %201 = vmatmul.mubr.f32.gmra.mrb[0].mxu0 %v53
    %v202 = vpop.f32.mrb[0].mxu0
    %v203 = vadd.f32 %v119, %v202
    %v204 = vpop.f32.mrb[0].mxu0
    %205 = vmatprep.mubr.f32.mxu0 0.0
    %206 = vmatmul.mubr.f32.gmra.mrb[0].mxu0 %v54
    %v207 = vpop.f32.mrb[0].mxu0
    %v208 = vadd.f32 %v119, %v207
    %v209 = vpop.f32.mrb[0].mxu0
    %210 = vmatprep.mubr.f32.mxu0 0.0
    %211 = vmatmul.mubr.f32.gmra.mrb[0].mxu0 %v55
    %v212 = vpop.f32.mrb[0].mxu0
    %v213 = vadd.f32 %v119, %v212
    %v214 = vpop.f32.mrb[0].mxu0
    %215 = vmatprep.mubr.f32.mxu0 0.0
    %216 = vmatmul.mubr.f32.gmra.mrb[0].mxu0 %v56
    %v217 = vpop.f32.mrb[0].mxu0
    %v218 = vadd.f32 %v119, %v217
    %v219 = vpop.f32.mrb[0].mxu0
    %220 = vmatprep.mubr.f32.mxu0 0.0
    %221 = vmatmul.mubr.f32.gmra.mrb[0].mxu0 %v57
    %v222 = vpop.f32.mrb[0].mxu0
    %v223 = vadd.f32 %v119, %v222
    %v224 = vpop.f32.mrb[0].mxu0
    %225 = vmatprep.mubr.f32.mxu0 0.0
    %226 = vmatmul.mubr.f32.gmra.mrb[0].mxu0 %v58
    %v227 = vpop.f32.mrb[0].mxu0
    %v228 = vadd.f32 %v119, %v227
    %v229 = vpop.f32.mrb[0].mxu0
    %230 = vmatprep.mubr.f32.mxu0 0.0
    %231 = vmatmul.mubr.f32.gmra.mrb[0].mxu0 %v59
    %v232 = vpop.f32.mrb[0].mxu0
    %v233 = vadd.f32 %v119, %v232
    %v234 = vpop.f32.mrb[0].mxu0
    %235 = vmatprep.mubr.f32.mxu0 0.0
    %236 = vmatmul.mubr.f32.gmra.mrb[0].mxu0 %v60
    %v237 = vpop.f32.mrb[0].mxu0
    %v238 = vadd.f32 %v119, %v237
    %v239 = vpop.f32.mrb[0].mxu0
    %240 = vmatprep.mubr.f32.mxu0 0.0
    %241 = vmatmul.mubr.f32.gmra.mrb[0].mxu0 %v61
    %v242 = vpop.f32.mrb[0].mxu0
    %v243 = vadd.f32 %v119, %v242
    %v244 = vpop.f32.mrb[0].mxu0
    %245 = vmatprep.mubr.f32.mxu0 0.0
    %246 = vmatmul.mubr.f32.gmra.mrb[0].mxu0 %v62
    %v247 = vpop.f32.mrb[0].mxu0
    %v248 = vadd.f32 %v119, %v247
    %v249 = vpop.f32.mrb[0].mxu0
    %250 = vmatprep.mubr.f32.mxu0 0.0
    %251 = vmatmul.mubr.f32.gmra.mrb[0].mxu0 %v63
    %v252 = vpop.f32.mrb[0].mxu0
    %v253 = vadd.f32 %v119, %v252
    %v254 = vpop.f32.mrb[0].mxu0
    %255 = vmatprep.mubr.f32.mxu0 0.0
    %256 = vmatmul.mubr.f32.gmra.mrb[0].mxu0 %v64
    %v257 = vpop.f32.mrb[0].mxu0
    %v258 = vadd.f32 %v119, %v257
    %v259 = vpop.f32.mrb[0].mxu0
    %260 = vmatprep.mubr.f32.mxu0 0.0
    %261 = vmatmul.mubr.f32.gmra.mrb[0].mxu0 %v65
    %v262 = vpop.f32.mrb[0].mxu0
    %v263 = vadd.f32 %v119, %v262
    %v264 = vpop.f32.mrb[0].mxu0
    %265 = vmatprep.mubr.f32.mxu0 0.0
    %266 = vmatmul.mubr.f32.gmra.mrb[0].mxu0 %v66
    %v267 = vpop.f32.mrb[0].mxu0
    %v268 = vadd.f32 %v119, %v267
    %v269 = vpop.f32.mrb[0].mxu0
    %270 = vmatprep.mubr.f32.mxu0 0.0
    %271 = vmatmul.mubr.f32.gmra.mrb[0].mxu0 %v67
    %v272 = vpop.f32.mrb[0].mxu0
    %v273 = vadd.f32 %v119, %v272
    %v274 = vpop.f32.mrb[0].mxu0
    %275 = vmatprep.mubr.f32.mxu0 0.0
    %276 = vmatmul.mubr.f32.gmra.mrb[0].mxu0 %v68
    %v277 = vpop.f32.mrb[0].mxu0
    %v278 = vadd.f32 %v119, %v277
    %v279 = vpop.f32.mrb[0].mxu0
    %280 = vmatprep.mubr.f32.mxu0 0.0
    %281 = vmatmul.mubr.f32.gmra.mrb[0].mxu0 %v69
    %v282 = vpop.f32.mrb[0].mxu0
    %v283 = vadd.f32 %v119, %v282
    %v284 = vpop.f32.mrb[0].mxu0
    %285 = vmatprep.mubr.f32.mxu0 0.0
    %286 = vmatmul.mubr.f32.gmra.mrb[0].mxu0 %v70
    %v287 = vpop.f32.mrb[0].mxu0
    %v288 = vadd.f32 %v119, %v287
    %v289 = vpop.f32.mrb[0].mxu0
    %290 = vmatprep.mubr.f32.mxu0 0.0
    %291 = vmatmul.mubr.f32.gmra.mrb[0].mxu0 %v71
    %v292 = vpop.f32.mrb[0].mxu0
    %v293 = vadd.f32 %v119, %v292
    %v294 = vpop.f32.mrb[0].mxu0
    %295 = vmatprep.mubr.f32.mxu0 0.0
    %296 = vmatmul.mubr.f32.gmra.mrb[0].mxu0 %v72
    %v297 = vpop.f32.mrb[0].mxu0
    %v298 = vadd.f32 %v119, %v297
    %v299 = vpop.f32.mrb[0].mxu0
    %300 = vmatprep.mubr.f32.mxu0 0.0
    %301 = vmatmul.mubr.f32.gmra.mrb[0].mxu0 %v73
    %v302 = vpop.f32.mrb[0].mxu0
    %v303 = vadd.f32 %v119, %v302
    %v304 = vpop.f32.mrb[0].mxu0
    %305 = vmatprep.mubr.f32.mxu0 0.0
    %306 = vmatmul.mubr.f32.gmra.mrb[0].mxu0 %v74
    %v307 = vpop.f32.mrb[0].mxu0
    %v308 = vadd.f32 %v119, %v307
    %v309 = vpop.f32.mrb[0].mxu0
    %310 = vmatprep.mubr.f32.mxu0 0.0
    %311 = vmatmul.mubr.f32.gmra.mrb[0].mxu0 %v75
    %v312 = vpop.f32.mrb[0].mxu0
    %v313 = vadd.f32 %v119, %v312
    %v314 = vpop.f32.mrb[0].mxu0
    %315 = vmatprep.mubr.f32.mxu0 0.0
    %316 = vmatmul.mubr.f32.gmra.mrb[0].mxu0 %v76
    %v317 = vpop.f32.mrb[0].mxu0
    %v318 = vadd.f32 %v119, %v317
    %v319 = vpop.f32.mrb[0].mxu0
    %320 = vmatprep.mubr.f32.mxu0 0.0
    %321 = vmatmul.mubr.f32.gmra.mrb[0].mxu0 %v77
    %v322 = vpop.f32.mrb[0].mxu0
    %v323 = vadd.f32 %v119, %v322
    %v324 = vpop.f32.mrb[0].mxu0
    %325 = vmatprep.mubr.f32.mxu0 0.0
    %326 = vmatmul.mubr.f32.gmra.mrb[0].mxu0 %v78
    %v327 = vpop.f32.mrb[0].mxu0
    %v328 = vadd.f32 %v119, %v327
    %v329 = vpop.f32.mrb[0].mxu0
    %330 = vmatprep.mubr.f32.mxu0 0.0
    %331 = vmatmul.mubr.f32.gmra.mrb[0].mxu0 %v79
    %v332 = vpop.f32.mrb[0].mxu0
    %v333 = vadd.f32 %v119, %v332
    %v334 = vpop.f32.mrb[0].mxu0
    %335 = vmatprep.mubr.f32.mxu0 0.0
    %336 = vmatmul.mubr.f32.gmra.mrb[0].mxu0 %v80
    %v337 = vpop.f32.mrb[0].mxu0
    %v338 = vadd.f32 %v119, %v337
    %v339 = vpop.f32.mrb[0].mxu0
    %340 = vmatprep.mubr.f32.mxu0 0.0
    %341 = vmatmul.mubr.f32.gmra.mrb[0].mxu0 %v81
    %v342 = vpop.f32.mrb[0].mxu0
    %v343 = vadd.f32 %v119, %v342
    %v344 = vpop.f32.mrb[0].mxu0
    %345 = vmatprep.mubr.f32.mxu0 0.0
    %346 = vmatmul.mubr.f32.gmra.mrb[0].mxu0 %v82
    %v347 = vpop.f32.mrb[0].mxu0
    %v348 = vadd.f32 %v119, %v347
    %v349 = vpop.f32.mrb[0].mxu0
    %350 = vmatprep.mubr.f32.mxu0 0.0
    %351 = vmatmul.mubr.f32.gmra.mrb[0].mxu0 %v83
    %v352 = vpop.f32.mrb[0].mxu0
    %v353 = vadd.f32 %v119, %v352
    %v354 = vpop.f32.mrb[0].mxu0
    %355 = vmatprep.mubr.f32.mxu0 0.0
    %356 = vmatmul.mubr.f32.gmra.mrb[0].mxu0 %v84
    %v357 = vpop.f32.mrb[0].mxu0
    %v358 = vadd.f32 %v119, %v357
    %v359 = vpop.f32.mrb[0].mxu0
    %360 = vmatprep.mubr.f32.mxu0 0.0
    %361 = vmatmul.mubr.f32.gmra.mrb[0].mxu0 %v85
    %v362 = vpop.f32.mrb[0].mxu0
    %v363 = vadd.f32 %v119, %v362
    %v364 = vpop.f32.mrb[0].mxu0
    %365 = vmatprep.mubr.f32.mxu0 0.0
    %366 = vmatmul.mubr.f32.gmra.mrb[0].mxu0 %v86
    %v367 = vpop.f32.mrb[0].mxu0
    %v368 = vadd.f32 %v119, %v367
    %v369 = vpop.f32.mrb[0].mxu0
    %370 = vmatprep.mubr.f32.mxu0 0.0
    %371 = vmatmul.mubr.f32.gmra.mrb[0].mxu0 %v87
    %v372 = vpop.f32.mrb[0].mxu0
    %v373 = vadd.f32 %v119, %v372
    %v374 = vpop.f32.mrb[0].mxu0
    %375 = vmatprep.mubr.f32.mxu0 0.0
    %376 = vmatmul.mubr.f32.gmra.mrb[0].mxu0 %v88
    %v377 = vpop.f32.mrb[0].mxu0
    %v378 = vadd.f32 %v119, %v377
    %v379 = vpop.f32.mrb[0].mxu0
    %380 = vmatprep.mubr.f32.mxu0 0.0
    %381 = vmatmul.mubr.f32.gmra.mrb[0].mxu0 %v89
    %v382 = vpop.f32.mrb[0].mxu0
    %v383 = vadd.f32 %v119, %v382
    %v384 = vpop.f32.mrb[0].mxu0
    %385 = vmatprep.mubr.f32.mxu0 0.0
    %386 = vmatmul.mubr.f32.gmra.mrb[0].mxu0 %v90
    %v387 = vpop.f32.mrb[0].mxu0
    %v388 = vadd.f32 %v119, %v387
    %v389 = vpop.f32.mrb[0].mxu0
    %390 = vmatprep.mubr.f32.mxu0 0.0
    %391 = vmatmul.mubr.f32.gmra.mrb[0].mxu0 %v91
    %v392 = vpop.f32.mrb[0].mxu0
    %v393 = vadd.f32 %v119, %v392
    %v394 = vpop.f32.mrb[0].mxu0
    %395 = vmatprep.mubr.f32.mxu0 0.0
    %396 = vmatmul.mubr.f32.gmra.mrb[0].mxu0 %v92
    %v397 = vpop.f32.mrb[0].mxu0
    %v398 = vadd.f32 %v119, %v397
    %v399 = vpop.f32.mrb[0].mxu0
    %400 = vmatprep.mubr.f32.mxu0 0.0
    %401 = vmatmul.mubr.f32.gmra.mrb[0].mxu0 %v93
    %v402 = vpop.f32.mrb[0].mxu0
    %v403 = vadd.f32 %v119, %v402
    %v404 = vpop.f32.mrb[0].mxu0
    %405 = vmatprep.mubr.f32.mxu0 0.0
    %406 = vmatmul.mubr.f32.gmra.mrb[0].mxu0 %v94
    %v407 = vpop.f32.mrb[0].mxu0
    %v408 = vadd.f32 %v119, %v407
    %v409 = vpop.f32.mrb[0].mxu0
    %410 = vmatprep.mubr.f32.mxu0 0.0
    %411 = vmatmul.mubr.f32.gmra.mrb[0].mxu0 %v95
    %v412 = vpop.f32.mrb[0].mxu0
    %v413 = vadd.f32 %v119, %v412
    %v414 = vpop.f32.mrb[0].mxu0
    %415 = vmatprep.mubr.f32.mxu0 0.0
    %416 = vmatmul.mubr.f32.gmra.mrb[0].mxu0 %v96
    %v417 = vpop.f32.mrb[0].mxu0
    %v418 = vadd.f32 %v119, %v417
    %v419 = vpop.f32.mrb[0].mxu0
    %420 = vmatprep.mubr.f32.mxu0 0.0
    %421 = vmatmul.mubr.f32.gmra.mrb[0].mxu0 %v97
    %v422 = vpop.f32.mrb[0].mxu0
    %v423 = vadd.f32 %v119, %v422
    %v424 = vpop.f32.mrb[0].mxu0
    %425 = vdwg.mxu0
    %v426 = vld [vmem:[%s4] sm:$0x1]
    %v427 = vsub.f32 1.0, %v426
    %v429 = vlaneseq
    %v430 = vshrl.u32 %v429, 7
    %v431 = vsub.s32 0, %v430
    %v432 = vrot.slane %v427, %v431
    %v434 = vmul.f32 %v188, %v432
    %v435 = vmul.f32 %v193, %v432
    %v436 = vmul.f32 %v198, %v432
    %v437 = vmul.f32 %v203, %v432
    %v438 = vmul.f32 %v208, %v432
    %v439 = vmul.f32 %v213, %v432
    %v440 = vmul.f32 %v218, %v432
    %v441 = vmul.f32 %v223, %v432
    %v442 = vmul.f32 %v228, %v432
    %v443 = vmul.f32 %v233, %v432
    %v444 = vmul.f32 %v238, %v432
    %v445 = vmul.f32 %v243, %v432
    %v446 = vmul.f32 %v248, %v432
    %v447 = vmul.f32 %v253, %v432
    %v448 = vmul.f32 %v258, %v432
    %v449 = vmul.f32 %v263, %v432
    %v450 = vmul.f32 %v268, %v432
    %v451 = vmul.f32 %v273, %v432
    %v452 = vmul.f32 %v278, %v432
    %v453 = vmul.f32 %v283, %v432
    %v454 = vmul.f32 %v288, %v432
    %v455 = vmul.f32 %v293, %v432
    %v456 = vmul.f32 %v298, %v432
    %v457 = vmul.f32 %v303, %v432
    %v458 = vmul.f32 %v308, %v432
    %v459 = vmul.f32 %v313, %v432
    %v460 = vmul.f32 %v318, %v432
    %v461 = vmul.f32 %v323, %v432
    %v462 = vmul.f32 %v328, %v432
    %v463 = vmul.f32 %v333, %v432
    %v464 = vmul.f32 %v338, %v432
    %v465 = vmul.f32 %v343, %v432
    %v466 = vmul.f32 %v348, %v432
    %v467 = vmul.f32 %v353, %v432
    %v468 = vmul.f32 %v358, %v432
    %v469 = vmul.f32 %v363, %v432
    %v470 = vmul.f32 %v368, %v432
    %v471 = vmul.f32 %v373, %v432
    %v472 = vmul.f32 %v378, %v432
    %v473 = vmul.f32 %v383, %v432
    %v474 = vmul.f32 %v388, %v432
    %v475 = vmul.f32 %v393, %v432
    %v476 = vmul.f32 %v398, %v432
    %v477 = vmul.f32 %v403, %v432
    %v478 = vmul.f32 %v408, %v432
    %v479 = vmul.f32 %v413, %v432
    %v480 = vmul.f32 %v418, %v432
    %v481 = vmul.f32 %v423, %v432
    %s482 = sld [smem:[#allocation2]]
    %v483 = vxor.u32 %v188, 2147483648
    %v484 = vxor.u32 %v193, 2147483648
    %v485 = vxor.u32 %v198, 2147483648
    %v486 = vxor.u32 %v203, 2147483648
    %v487 = vxor.u32 %v208, 2147483648
    %v488 = vxor.u32 %v213, 2147483648
    %v489 = vxor.u32 %v218, 2147483648
    %v490 = vxor.u32 %v223, 2147483648
    %v491 = vxor.u32 %v228, 2147483648
    %v492 = vxor.u32 %v233, 2147483648
    %v493 = vxor.u32 %v238, 2147483648
    %v494 = vxor.u32 %v243, 2147483648
    %v495 = vxor.u32 %v248, 2147483648
    %v496 = vxor.u32 %v253, 2147483648
    %v497 = vxor.u32 %v258, 2147483648
    %v498 = vxor.u32 %v263, 2147483648
    %v499 = vxor.u32 %v268, 2147483648
    %v500 = vxor.u32 %v273, 2147483648
    %v501 = vxor.u32 %v278, 2147483648
    %v502 = vxor.u32 %v283, 2147483648
    %v503 = vxor.u32 %v288, 2147483648
    %v504 = vxor.u32 %v293, 2147483648
    %v505 = vxor.u32 %v298, 2147483648
    %v506 = vxor.u32 %v303, 2147483648
    %v507 = vxor.u32 %v308, 2147483648
    %v508 = vxor.u32 %v313, 2147483648
    %v509 = vxor.u32 %v318, 2147483648
    %v510 = vxor.u32 %v323, 2147483648
    %v511 = vxor.u32 %v328, 2147483648
    %v512 = vxor.u32 %v333, 2147483648
    %v513 = vxor.u32 %v338, 2147483648
    %v514 = vxor.u32 %v343, 2147483648
    %v515 = vxor.u32 %v348, 2147483648
    %v516 = vxor.u32 %v353, 2147483648
    %v517 = vxor.u32 %v358, 2147483648
    %v518 = vxor.u32 %v363, 2147483648
    %v519 = vxor.u32 %v368, 2147483648
    %v520 = vxor.u32 %v373, 2147483648
    %v521 = vxor.u32 %v378, 2147483648
    %v522 = vxor.u32 %v383, 2147483648
    %v523 = vxor.u32 %v388, 2147483648
    %v524 = vxor.u32 %v393, 2147483648
    %v525 = vxor.u32 %v398, 2147483648
    %v526 = vxor.u32 %v403, 2147483648
    %v527 = vxor.u32 %v408, 2147483648
    %v528 = vxor.u32 %v413, 2147483648
    %v529 = vxor.u32 %v418, 2147483648
    %v530 = vxor.u32 %v423, 2147483648
    %v531 = vmul.f32 %v483, 1.442695
    %v532 = vpow.pop %v531
    %v533 = vmul.f32 %v484, 1.442695
    %v534 = vpow.pop %v533
    %v535 = vmul.f32 %v485, 1.442695
    %v536 = vpow.pop %v535
    %v537 = vmul.f32 %v486, 1.442695
    %v538 = vpow.pop %v537
    %v539 = vmul.f32 %v487, 1.442695
    %v540 = vpow.pop %v539
    %v541 = vmul.f32 %v488, 1.442695
    %v542 = vpow.pop %v541
    %v543 = vmul.f32 %v489, 1.442695
    %v544 = vpow.pop %v543
    %v545 = vmul.f32 %v490, 1.442695
    %v546 = vpow.pop %v545
    %v547 = vmul.f32 %v491, 1.442695
    %v548 = vpow.pop %v547
    %v549 = vmul.f32 %v492, 1.442695
    %v550 = vpow.pop %v549
    %v551 = vmul.f32 %v493, 1.442695
    %v552 = vpow.pop %v551
    %v553 = vmul.f32 %v494, 1.442695
    %v554 = vpow.pop %v553
    %v555 = vmul.f32 %v495, 1.442695
    %v556 = vpow.pop %v555
    %v557 = vmul.f32 %v496, 1.442695
    %v558 = vpow.pop %v557
    %v559 = vmul.f32 %v497, 1.442695
    %v560 = vpow.pop %v559
    %v561 = vmul.f32 %v498, 1.442695
    %v562 = vpow.pop %v561
    %v563 = vmul.f32 %v499, 1.442695
    %v564 = vpow.pop %v563
    %v565 = vmul.f32 %v500, 1.442695
    %v566 = vpow.pop %v565
    %v567 = vmul.f32 %v501, 1.442695
    %v568 = vpow.pop %v567
    %v569 = vmul.f32 %v502, 1.442695
    %v570 = vpow.pop %v569
    %v571 = vmul.f32 %v503, 1.442695
    %v572 = vpow.pop %v571
    %v573 = vmul.f32 %v504, 1.442695
    %v574 = vpow.pop %v573
    %v575 = vmul.f32 %v505, 1.442695
    %v576 = vpow.pop %v575
    %v577 = vmul.f32 %v506, 1.442695
    %v578 = vpow.pop %v577
    %v579 = vmul.f32 %v507, 1.442695
    %v580 = vpow.pop %v579
    %v581 = vmul.f32 %v508, 1.442695
    %v582 = vpow.pop %v581
    %v583 = vmul.f32 %v509, 1.442695
    %v584 = vpow.pop %v583
    %v585 = vmul.f32 %v510, 1.442695
    %v586 = vpow.pop %v585
    %v587 = vmul.f32 %v511, 1.442695
    %v588 = vpow.pop %v587
    %v589 = vmul.f32 %v512, 1.442695
    %v590 = vpow.pop %v589
    %v591 = vmul.f32 %v513, 1.442695
    %v592 = vpow.pop %v591
    %v593 = vmul.f32 %v514, 1.442695
    %v594 = vpow.pop %v593
    %v595 = vmul.f32 %v515, 1.442695
    %v596 = vpow.pop %v595
    %v597 = vmul.f32 %v516, 1.442695
    %v598 = vpow.pop %v597
    %v599 = vmul.f32 %v517, 1.442695
    %v600 = vpow.pop %v599
    %v601 = vmul.f32 %v518, 1.442695
    %v602 = vpow.pop %v601
    %v603 = vmul.f32 %v519, 1.442695
    %v604 = vpow.pop %v603
    %v605 = vmul.f32 %v520, 1.442695
    %v606 = vpow.pop %v605
    %v607 = vmul.f32 %v521, 1.442695
    %v608 = vpow.pop %v607
    %v609 = vmul.f32 %v522, 1.442695
    %v610 = vpow.pop %v609
    %v611 = vmul.f32 %v523, 1.442695
    %v612 = vpow.pop %v611
    %v613 = vmul.f32 %v524, 1.442695
    %v614 = vpow.pop %v613
    %v615 = vmul.f32 %v525, 1.442695
    %v616 = vpow.pop %v615
    %v617 = vmul.f32 %v526, 1.442695
    %v618 = vpow.pop %v617
    %v619 = vmul.f32 %v527, 1.442695
    %v620 = vpow.pop %v619
    %v621 = vmul.f32 %v528, 1.442695
    %v622 = vpow.pop %v621
    %v623 = vmul.f32 %v529, 1.442695
    %v624 = vpow.pop %v623
    %v625 = vmul.f32 %v530, 1.442695
    %v626 = vpow.pop %v625
    %v627 = vadd.f32 %v532, 1.0
    %v628 = vadd.f32 %v534, 1.0
    %v629 = vadd.f32 %v536, 1.0
    %v630 = vadd.f32 %v538, 1.0
    %v631 = vadd.f32 %v540, 1.0
    %v632 = vadd.f32 %v542, 1.0
    %v633 = vadd.f32 %v544, 1.0
    %v634 = vadd.f32 %v546, 1.0
    %v635 = vadd.f32 %v548, 1.0
    %v636 = vadd.f32 %v550, 1.0
    %v637 = vadd.f32 %v552, 1.0
    %v638 = vadd.f32 %v554, 1.0
    %v639 = vadd.f32 %v556, 1.0
    %v640 = vadd.f32 %v558, 1.0
    %v641 = vadd.f32 %v560, 1.0
    %v642 = vadd.f32 %v562, 1.0
    %v643 = vadd.f32 %v564, 1.0
    %v644 = vadd.f32 %v566, 1.0
    %v645 = vadd.f32 %v568, 1.0
    %v646 = vadd.f32 %v570, 1.0
    %v647 = vadd.f32 %v572, 1.0
    %v648 = vadd.f32 %v574, 1.0
    %v649 = vadd.f32 %v576, 1.0
    %v650 = vadd.f32 %v578, 1.0
    %v651 = vadd.f32 %v580, 1.0
    %v652 = vadd.f32 %v582, 1.0
    %v653 = vadd.f32 %v584, 1.0
    %v654 = vadd.f32 %v586, 1.0
    %v655 = vadd.f32 %v588, 1.0
    %v656 = vadd.f32 %v590, 1.0
    %v657 = vadd.f32 %v592, 1.0
    %v658 = vadd.f32 %v594, 1.0
    %v659 = vadd.f32 %v596, 1.0
    %v660 = vadd.f32 %v598, 1.0
    %v661 = vadd.f32 %v600, 1.0
    %v662 = vadd.f32 %v602, 1.0
    %v663 = vadd.f32 %v604, 1.0
    %v664 = vadd.f32 %v606, 1.0
    %v665 = vadd.f32 %v608, 1.0
    %v666 = vadd.f32 %v610, 1.0
    %v667 = vadd.f32 %v612, 1.0
    %v668 = vadd.f32 %v614, 1.0
    %v669 = vadd.f32 %v616, 1.0
    %v670 = vadd.f32 %v618, 1.0
    %v671 = vadd.f32 %v620, 1.0
    %v672 = vadd.f32 %v622, 1.0
    %v673 = vadd.f32 %v624, 1.0
    %v674 = vadd.f32 %v626, 1.0
    %v675 = vrcp.pop %v627
    %v676 = vmul.f32 1.0, %v675
    %v677 = vrcp.pop %v628
    %v678 = vmul.f32 1.0, %v677
    %v679 = vrcp.pop %v629
    %v680 = vmul.f32 1.0, %v679
    %v681 = vrcp.pop %v630
    %v682 = vmul.f32 1.0, %v681
    %v683 = vrcp.pop %v631
    %v684 = vmul.f32 1.0, %v683
    %v685 = vrcp.pop %v632
    %v686 = vmul.f32 1.0, %v685
    %v687 = vrcp.pop %v633
    %v688 = vmul.f32 1.0, %v687
    %v689 = vrcp.pop %v634
    %v690 = vmul.f32 1.0, %v689
    %v691 = vrcp.pop %v635
    %v692 = vmul.f32 1.0, %v691
    %v693 = vrcp.pop %v636
    %v694 = vmul.f32 1.0, %v693
    %v695 = vrcp.pop %v637
    %v696 = vmul.f32 1.0, %v695
    %v697 = vrcp.pop %v638
    %v698 = vmul.f32 1.0, %v697
    %v699 = vrcp.pop %v639
    %v700 = vmul.f32 1.0, %v699
    %v701 = vrcp.pop %v640
    %v702 = vmul.f32 1.0, %v701
    %v703 = vrcp.pop %v641
    %v704 = vmul.f32 1.0, %v703
    %v705 = vrcp.pop %v642
    %v706 = vmul.f32 1.0, %v705
    %v707 = vrcp.pop %v643
    %v708 = vmul.f32 1.0, %v707
    %v709 = vrcp.pop %v644
    %v710 = vmul.f32 1.0, %v709
    %v711 = vrcp.pop %v645
    %v712 = vmul.f32 1.0, %v711
    %v713 = vrcp.pop %v646
    %v714 = vmul.f32 1.0, %v713
    %v715 = vrcp.pop %v647
    %v716 = vmul.f32 1.0, %v715
    %v717 = vrcp.pop %v648
    %v718 = vmul.f32 1.0, %v717
    %v719 = vrcp.pop %v649
    %v720 = vmul.f32 1.0, %v719
    %v721 = vrcp.pop %v650
    %v722 = vmul.f32 1.0, %v721
    %v723 = vrcp.pop %v651
    %v724 = vmul.f32 1.0, %v723
    %v725 = vrcp.pop %v652
    %v726 = vmul.f32 1.0, %v725
    %v727 = vrcp.pop %v653
    %v728 = vmul.f32 1.0, %v727
    %v729 = vrcp.pop %v654
    %v730 = vmul.f32 1.0, %v729
    %v731 = vrcp.pop %v655
    %v732 = vmul.f32 1.0, %v731
    %v733 = vrcp.pop %v656
    %v734 = vmul.f32 1.0, %v733
    %v735 = vrcp.pop %v657
    %v736 = vmul.f32 1.0, %v735
    %v737 = vrcp.pop %v658
    %v738 = vmul.f32 1.0, %v737
    %v739 = vrcp.pop %v659
    %v740 = vmul.f32 1.0, %v739
    %v741 = vrcp.pop %v660
    %v742 = vmul.f32 1.0, %v741
    %v743 = vrcp.pop %v661
    %v744 = vmul.f32 1.0, %v743
    %v745 = vrcp.pop %v662
    %v746 = vmul.f32 1.0, %v745
    %v747 = vrcp.pop %v663
    %v748 = vmul.f32 1.0, %v747
    %v749 = vrcp.pop %v664
    %v750 = vmul.f32 1.0, %v749
    %v751 = vrcp.pop %v665
    %v752 = vmul.f32 1.0, %v751
    %v753 = vrcp.pop %v666
    %v754 = vmul.f32 1.0, %v753
    %v755 = vrcp.pop %v667
    %v756 = vmul.f32 1.0, %v755
    %v757 = vrcp.pop %v668
    %v758 = vmul.f32 1.0, %v757
    %v759 = vrcp.pop %v669
    %v760 = vmul.f32 1.0, %v759
    %v761 = vrcp.pop %v670
    %v762 = vmul.f32 1.0, %v761
    %v763 = vrcp.pop %v671
    %v764 = vmul.f32 1.0, %v763
    %v765 = vrcp.pop %v672
    %v766 = vmul.f32 1.0, %v765
    %v767 = vrcp.pop %v673
    %v768 = vmul.f32 1.0, %v767
    %v769 = vrcp.pop %v674
    %v770 = vmul.f32 1.0, %v769
    %v771 = vstv %s482
    %v772 = vmul.f32 %v676, %v771
    %v773 = vmul.f32 %v678, %v771
    %v774 = vmul.f32 %v680, %v771
    %v775 = vmul.f32 %v682, %v771
    %v776 = vmul.f32 %v684, %v771
    %v777 = vmul.f32 %v686, %v771
    %v778 = vmul.f32 %v688, %v771
    %v779 = vmul.f32 %v690, %v771
    %v780 = vmul.f32 %v692, %v771
    %v781 = vmul.f32 %v694, %v771
    %v782 = vmul.f32 %v696, %v771
    %v783 = vmul.f32 %v698, %v771
    %v784 = vmul.f32 %v700, %v771
    %v785 = vmul.f32 %v702, %v771
    %v786 = vmul.f32 %v704, %v771
    %v787 = vmul.f32 %v706, %v771
    %v788 = vmul.f32 %v708, %v771
    %v789 = vmul.f32 %v710, %v771
    %v790 = vmul.f32 %v712, %v771
    %v791 = vmul.f32 %v714, %v771
    %v792 = vmul.f32 %v716, %v771
    %v793 = vmul.f32 %v718, %v771
    %v794 = vmul.f32 %v720, %v771
    %v795 = vmul.f32 %v722, %v771
    %v796 = vmul.f32 %v724, %v771
    %v797 = vmul.f32 %v726, %v771
    %v798 = vmul.f32 %v728, %v771
    %v799 = vmul.f32 %v730, %v771
    %v800 = vmul.f32 %v732, %v771
    %v801 = vmul.f32 %v734, %v771
    %v802 = vmul.f32 %v736, %v771
    %v803 = vmul.f32 %v738, %v771
    %v804 = vmul.f32 %v740, %v771
    %v805 = vmul.f32 %v742, %v771
    %v806 = vmul.f32 %v744, %v771
    %v807 = vmul.f32 %v746, %v771
    %v808 = vmul.f32 %v748, %v771
    %v809 = vmul.f32 %v750, %v771
    %v810 = vmul.f32 %v752, %v771
    %v811 = vmul.f32 %v754, %v771
    %v812 = vmul.f32 %v756, %v771
    %v813 = vmul.f32 %v758, %v771
    %v814 = vmul.f32 %v760, %v771
    %v815 = vmul.f32 %v762, %v771
    %v816 = vmul.f32 %v764, %v771
    %v817 = vmul.f32 %v766, %v771
    %v818 = vmul.f32 %v768, %v771
    %v819 = vmul.f32 %v770, %v771
    %v820 = vadd.f32 %v772, 1.5
    %v821 = vadd.f32 %v773, 1.5
    %v822 = vadd.f32 %v774, 1.5
    %v823 = vadd.f32 %v775, 1.5
    %v824 = vadd.f32 %v776, 1.5
    %v825 = vadd.f32 %v777, 1.5
    %v826 = vadd.f32 %v778, 1.5
    %v827 = vadd.f32 %v779, 1.5
    %v828 = vadd.f32 %v780, 1.5
    %v829 = vadd.f32 %v781, 1.5
    %v830 = vadd.f32 %v782, 1.5
    %v831 = vadd.f32 %v783, 1.5
    %v832 = vadd.f32 %v784, 1.5
    %v833 = vadd.f32 %v785, 1.5
    %v834 = vadd.f32 %v786, 1.5
    %v835 = vadd.f32 %v787, 1.5
    %v836 = vadd.f32 %v788, 1.5
    %v837 = vadd.f32 %v789, 1.5
    %v838 = vadd.f32 %v790, 1.5
    %v839 = vadd.f32 %v791, 1.5
    %v840 = vadd.f32 %v792, 1.5
    %v841 = vadd.f32 %v793, 1.5
    %v842 = vadd.f32 %v794, 1.5
    %v843 = vadd.f32 %v795, 1.5
    %v844 = vadd.f32 %v796, 1.5
    %v845 = vadd.f32 %v797, 1.5
    %v846 = vadd.f32 %v798, 1.5
    %v847 = vadd.f32 %v799, 1.5
    %v848 = vadd.f32 %v800, 1.5
    %v849 = vadd.f32 %v801, 1.5
    %v850 = vadd.f32 %v802, 1.5
    %v851 = vadd.f32 %v803, 1.5
    %v852 = vadd.f32 %v804, 1.5
    %v853 = vadd.f32 %v805, 1.5
    %v854 = vadd.f32 %v806, 1.5
    %v855 = vadd.f32 %v807, 1.5
    %v856 = vadd.f32 %v808, 1.5
    %v857 = vadd.f32 %v809, 1.5
    %v858 = vadd.f32 %v810, 1.5
    %v859 = vadd.f32 %v811, 1.5
    %v860 = vadd.f32 %v812, 1.5
    %v861 = vadd.f32 %v813, 1.5
    %v862 = vadd.f32 %v814, 1.5
    %v863 = vadd.f32 %v815, 1.5
    %v864 = vadd.f32 %v816, 1.5
    %v865 = vadd.f32 %v817, 1.5
    %v866 = vadd.f32 %v818, 1.5
    %v867 = vadd.f32 %v819, 1.5
    %v868 = vmul.f32 %v434, %v434
    %v869 = vmul.f32 %v435, %v435
    %v870 = vmul.f32 %v436, %v436
    %v871 = vmul.f32 %v437, %v437
    %v872 = vmul.f32 %v438, %v438
    %v873 = vmul.f32 %v439, %v439
    %v874 = vmul.f32 %v440, %v440
    %v875 = vmul.f32 %v441, %v441
    %v876 = vmul.f32 %v442, %v442
    %v877 = vmul.f32 %v443, %v443
    %v878 = vmul.f32 %v444, %v444
    %v879 = vmul.f32 %v445, %v445
    %v880 = vmul.f32 %v446, %v446
    %v881 = vmul.f32 %v447, %v447
    %v882 = vmul.f32 %v448, %v448
    %v883 = vmul.f32 %v449, %v449
    %v884 = vmul.f32 %v450, %v450
    %v885 = vmul.f32 %v451, %v451
    %v886 = vmul.f32 %v452, %v452
    %v887 = vmul.f32 %v453, %v453
    %v888 = vmul.f32 %v454, %v454
    %v889 = vmul.f32 %v455, %v455
    %v890 = vmul.f32 %v456, %v456
    %v891 = vmul.f32 %v457, %v457
    %v892 = vmul.f32 %v458, %v458
    %v893 = vmul.f32 %v459, %v459
    %v894 = vmul.f32 %v460, %v460
    %v895 = vmul.f32 %v461, %v461
    %v896 = vmul.f32 %v462, %v462
    %v897 = vmul.f32 %v463, %v463
    %v898 = vmul.f32 %v464, %v464
    %v899 = vmul.f32 %v465, %v465
    %v900 = vmul.f32 %v466, %v466
    %v901 = vmul.f32 %v467, %v467
    %v902 = vmul.f32 %v468, %v468
    %v903 = vmul.f32 %v469, %v469
    %v904 = vmul.f32 %v470, %v470
    %v905 = vmul.f32 %v471, %v471
    %v906 = vmul.f32 %v472, %v472
    %v907 = vmul.f32 %v473, %v473
    %v908 = vmul.f32 %v474, %v474
    %v909 = vmul.f32 %v475, %v475
    %v910 = vmul.f32 %v476, %v476
    %v911 = vmul.f32 %v477, %v477
    %v912 = vmul.f32 %v478, %v478
    %v913 = vmul.f32 %v479, %v479
    %v914 = vmul.f32 %v480, %v480
    %v915 = vmul.f32 %v481, %v481
    %916 = vadd.xlane.f32.xlu0 %v868
    %v917 = vpop.xlane.xlu0 %916
    %918 = vadd.xlane.f32.xlu0 %v869
    %v919 = vpop.xlane.xlu0 %918
    %920 = vadd.xlane.f32.xlu0 %v870
    %v921 = vpop.xlane.xlu0 %920
    %922 = vadd.xlane.f32.xlu0 %v871
    %v923 = vpop.xlane.xlu0 %922
    %924 = vadd.xlane.f32.xlu0 %v872
    %v925 = vpop.xlane.xlu0 %924
    %926 = vadd.xlane.f32.xlu0 %v873
    %v927 = vpop.xlane.xlu0 %926
    %928 = vadd.xlane.f32.xlu0 %v874
    %v929 = vpop.xlane.xlu0 %928
    %930 = vadd.xlane.f32.xlu0 %v875
    %v931 = vpop.xlane.xlu0 %930
    %932 = vadd.xlane.f32.xlu0 %v876
    %v933 = vpop.xlane.xlu0 %932
    %934 = vadd.xlane.f32.xlu0 %v877
    %v935 = vpop.xlane.xlu0 %934
    %936 = vadd.xlane.f32.xlu0 %v878
    %v937 = vpop.xlane.xlu0 %936
    %938 = vadd.xlane.f32.xlu0 %v879
    %v939 = vpop.xlane.xlu0 %938
    %940 = vadd.xlane.f32.xlu0 %v880
    %v941 = vpop.xlane.xlu0 %940
    %942 = vadd.xlane.f32.xlu0 %v881
    %v943 = vpop.xlane.xlu0 %942
    %944 = vadd.xlane.f32.xlu0 %v882
    %v945 = vpop.xlane.xlu0 %944
    %946 = vadd.xlane.f32.xlu0 %v883
    %v947 = vpop.xlane.xlu0 %946
    %948 = vadd.xlane.f32.xlu0 %v884
    %v949 = vpop.xlane.xlu0 %948
    %950 = vadd.xlane.f32.xlu0 %v885
    %v951 = vpop.xlane.xlu0 %950
    %952 = vadd.xlane.f32.xlu0 %v886
    %v953 = vpop.xlane.xlu0 %952
    %954 = vadd.xlane.f32.xlu0 %v887
    %v955 = vpop.xlane.xlu0 %954
    %956 = vadd.xlane.f32.xlu0 %v888
    %v957 = vpop.xlane.xlu0 %956
    %958 = vadd.xlane.f32.xlu0 %v889
    %v959 = vpop.xlane.xlu0 %958
    %960 = vadd.xlane.f32.xlu0 %v890
    %v961 = vpop.xlane.xlu0 %960
    %962 = vadd.xlane.f32.xlu0 %v891
    %v963 = vpop.xlane.xlu0 %962
    %964 = vadd.xlane.f32.xlu0 %v892
    %v965 = vpop.xlane.xlu0 %964
    %966 = vadd.xlane.f32.xlu0 %v893
    %v967 = vpop.xlane.xlu0 %966
    %968 = vadd.xlane.f32.xlu0 %v894
    %v969 = vpop.xlane.xlu0 %968
    %970 = vadd.xlane.f32.xlu0 %v895
    %v971 = vpop.xlane.xlu0 %970
    %972 = vadd.xlane.f32.xlu0 %v896
    %v973 = vpop.xlane.xlu0 %972
    %974 = vadd.xlane.f32.xlu0 %v897
    %v975 = vpop.xlane.xlu0 %974
    %976 = vadd.xlane.f32.xlu0 %v898
    %v977 = vpop.xlane.xlu0 %976
    %978 = vadd.xlane.f32.xlu0 %v899
    %v979 = vpop.xlane.xlu0 %978
    %980 = vadd.xlane.f32.xlu0 %v900
    %v981 = vpop.xlane.xlu0 %980
    %982 = vadd.xlane.f32.xlu0 %v901
    %v983 = vpop.xlane.xlu0 %982
    %984 = vadd.xlane.f32.xlu0 %v902
    %v985 = vpop.xlane.xlu0 %984
    %986 = vadd.xlane.f32.xlu0 %v903
    %v987 = vpop.xlane.xlu0 %986
    %988 = vadd.xlane.f32.xlu0 %v904
    %v989 = vpop.xlane.xlu0 %988
    %990 = vadd.xlane.f32.xlu0 %v905
    %v991 = vpop.xlane.xlu0 %990
    %992 = vadd.xlane.f32.xlu0 %v906
    %v993 = vpop.xlane.xlu0 %992
    %994 = vadd.xlane.f32.xlu0 %v907
    %v995 = vpop.xlane.xlu0 %994
    %996 = vadd.xlane.f32.xlu0 %v908
    %v997 = vpop.xlane.xlu0 %996
    %998 = vadd.xlane.f32.xlu0 %v909
    %v999 = vpop.xlane.xlu0 %998
    %1000 = vadd.xlane.f32.xlu0 %v910
    %v1001 = vpop.xlane.xlu0 %1000
    %1002 = vadd.xlane.f32.xlu0 %v911
    %v1003 = vpop.xlane.xlu0 %1002
    %1004 = vadd.xlane.f32.xlu0 %v912
    %v1005 = vpop.xlane.xlu0 %1004
    %1006 = vadd.xlane.f32.xlu0 %v913
    %v1007 = vpop.xlane.xlu0 %1006
    %1008 = vadd.xlane.f32.xlu0 %v914
    %v1009 = vpop.xlane.xlu0 %1008
    %1010 = vadd.xlane.f32.xlu0 %v915
    %v1011 = vpop.xlane.xlu0 %1010
    %v1012 = vmul.f32 %v820, %v820
    %v1013 = vmul.f32 %v821, %v821
    %v1014 = vmul.f32 %v822, %v822
    %v1015 = vmul.f32 %v823, %v823
    %v1016 = vmul.f32 %v824, %v824
    %v1017 = vmul.f32 %v825, %v825
    %v1018 = vmul.f32 %v826, %v826
    %v1019 = vmul.f32 %v827, %v827
    %v1020 = vmul.f32 %v828, %v828
    %v1021 = vmul.f32 %v829, %v829
    %v1022 = vmul.f32 %v830, %v830
    %v1023 = vmul.f32 %v831, %v831
    %v1024 = vmul.f32 %v832, %v832
    %v1025 = vmul.f32 %v833, %v833
    %v1026 = vmul.f32 %v834, %v834
    %v1027 = vmul.f32 %v835, %v835
    %v1028 = vmul.f32 %v836, %v836
    %v1029 = vmul.f32 %v837, %v837
    %v1030 = vmul.f32 %v838, %v838
    %v1031 = vmul.f32 %v839, %v839
    %v1032 = vmul.f32 %v840, %v840
    %v1033 = vmul.f32 %v841, %v841
    %v1034 = vmul.f32 %v842, %v842
    %v1035 = vmul.f32 %v843, %v843
    %v1036 = vmul.f32 %v844, %v844
    %v1037 = vmul.f32 %v845, %v845
    %v1038 = vmul.f32 %v846, %v846
    %v1039 = vmul.f32 %v847, %v847
    %v1040 = vmul.f32 %v848, %v848
    %v1041 = vmul.f32 %v849, %v849
    %v1042 = vmul.f32 %v850, %v850
    %v1043 = vmul.f32 %v851, %v851
    %v1044 = vmul.f32 %v852, %v852
    %v1045 = vmul.f32 %v853, %v853
    %v1046 = vmul.f32 %v854, %v854
    %v1047 = vmul.f32 %v855, %v855
    %v1048 = vmul.f32 %v856, %v856
    %v1049 = vmul.f32 %v857, %v857
    %v1050 = vmul.f32 %v858, %v858
    %v1051 = vmul.f32 %v859, %v859
    %v1052 = vmul.f32 %v860, %v860
    %v1053 = vmul.f32 %v861, %v861
    %v1054 = vmul.f32 %v862, %v862
    %v1055 = vmul.f32 %v863, %v863
    %v1056 = vmul.f32 %v864, %v864
    %v1057 = vmul.f32 %v865, %v865
    %v1058 = vmul.f32 %v866, %v866
    %v1059 = vmul.f32 %v867, %v867
    %v1060 = vsub.f32 %v1012, 1.0
    %v1061 = vsub.f32 %v1013, 1.0
    %v1062 = vsub.f32 %v1014, 1.0
    %v1063 = vsub.f32 %v1015, 1.0
    %v1064 = vsub.f32 %v1016, 1.0
    %v1065 = vsub.f32 %v1017, 1.0
    %v1066 = vsub.f32 %v1018, 1.0
    %v1067 = vsub.f32 %v1019, 1.0
    %v1068 = vsub.f32 %v1020, 1.0
    %v1069 = vsub.f32 %v1021, 1.0
    %v1070 = vsub.f32 %v1022, 1.0
    %v1071 = vsub.f32 %v1023, 1.0
    %v1072 = vsub.f32 %v1024, 1.0
    %v1073 = vsub.f32 %v1025, 1.0
    %v1074 = vsub.f32 %v1026, 1.0
    %v1075 = vsub.f32 %v1027, 1.0
    %v1076 = vsub.f32 %v1028, 1.0
    %v1077 = vsub.f32 %v1029, 1.0
    %v1078 = vsub.f32 %v1030, 1.0
    %v1079 = vsub.f32 %v1031, 1.0
    %v1080 = vsub.f32 %v1032, 1.0
    %v1081 = vsub.f32 %v1033, 1.0
    %v1082 = vsub.f32 %v1034, 1.0
    %v1083 = vsub.f32 %v1035, 1.0
    %v1084 = vsub.f32 %v1036, 1.0
    %v1085 = vsub.f32 %v1037, 1.0
    %v1086 = vsub.f32 %v1038, 1.0
    %v1087 = vsub.f32 %v1039, 1.0
    %v1088 = vsub.f32 %v1040, 1.0
    %v1089 = vsub.f32 %v1041, 1.0
    %v1090 = vsub.f32 %v1042, 1.0
    %v1091 = vsub.f32 %v1043, 1.0
    %v1092 = vsub.f32 %v1044, 1.0
    %v1093 = vsub.f32 %v1045, 1.0
    %v1094 = vsub.f32 %v1046, 1.0
    %v1095 = vsub.f32 %v1047, 1.0
    %v1096 = vsub.f32 %v1048, 1.0
    %v1097 = vsub.f32 %v1049, 1.0
    %v1098 = vsub.f32 %v1050, 1.0
    %v1099 = vsub.f32 %v1051, 1.0
    %v1100 = vsub.f32 %v1052, 1.0
    %v1101 = vsub.f32 %v1053, 1.0
    %v1102 = vsub.f32 %v1054, 1.0
    %v1103 = vsub.f32 %v1055, 1.0
    %v1104 = vsub.f32 %v1056, 1.0
    %v1105 = vsub.f32 %v1057, 1.0
    %v1106 = vsub.f32 %v1058, 1.0
    %v1107 = vsub.f32 %v1059, 1.0
    %v1108 = vmax.f32 %v917, 1e-08
    %v1109 = vmax.f32 %v919, 1e-08
    %v1110 = vmax.f32 %v921, 1e-08
    %v1111 = vmax.f32 %v923, 1e-08
    %v1112 = vmax.f32 %v925, 1e-08
    %v1113 = vmax.f32 %v927, 1e-08
    %v1114 = vmax.f32 %v929, 1e-08
    %v1115 = vmax.f32 %v931, 1e-08
    %v1116 = vmax.f32 %v933, 1e-08
    %v1117 = vmax.f32 %v935, 1e-08
    %v1118 = vmax.f32 %v937, 1e-08
    %v1119 = vmax.f32 %v939, 1e-08
    %v1120 = vmax.f32 %v941, 1e-08
    %v1121 = vmax.f32 %v943, 1e-08
    %v1122 = vmax.f32 %v945, 1e-08
    %v1123 = vmax.f32 %v947, 1e-08
    %v1124 = vmax.f32 %v949, 1e-08
    %v1125 = vmax.f32 %v951, 1e-08
    %v1126 = vmax.f32 %v953, 1e-08
    %v1127 = vmax.f32 %v955, 1e-08
    %v1128 = vmax.f32 %v957, 1e-08
    %v1129 = vmax.f32 %v959, 1e-08
    %v1130 = vmax.f32 %v961, 1e-08
    %v1131 = vmax.f32 %v963, 1e-08
    %v1132 = vmax.f32 %v965, 1e-08
    %v1133 = vmax.f32 %v967, 1e-08
    %v1134 = vmax.f32 %v969, 1e-08
    %v1135 = vmax.f32 %v971, 1e-08
    %v1136 = vmax.f32 %v973, 1e-08
    %v1137 = vmax.f32 %v975, 1e-08
    %v1138 = vmax.f32 %v977, 1e-08
    %v1139 = vmax.f32 %v979, 1e-08
    %v1140 = vmax.f32 %v981, 1e-08
    %v1141 = vmax.f32 %v983, 1e-08
    %v1142 = vmax.f32 %v985, 1e-08
    %v1143 = vmax.f32 %v987, 1e-08
    %v1144 = vmax.f32 %v989, 1e-08
    %v1145 = vmax.f32 %v991, 1e-08
    %v1146 = vmax.f32 %v993, 1e-08
    %v1147 = vmax.f32 %v995, 1e-08
    %v1148 = vmax.f32 %v997, 1e-08
    %v1149 = vmax.f32 %v999, 1e-08
    %v1150 = vmax.f32 %v1001, 1e-08
    %v1151 = vmax.f32 %v1003, 1e-08
    %v1152 = vmax.f32 %v1005, 1e-08
    %v1153 = vmax.f32 %v1007, 1e-08
    %v1154 = vmax.f32 %v1009, 1e-08
    %v1155 = vmax.f32 %v1011, 1e-08
    %v1156 = vrcp.pop %v1108
    %v1157 = vmul.f32 %v1060, %v1156
    %v1158 = vrcp.pop %v1109
    %v1159 = vmul.f32 %v1061, %v1158
    %v1160 = vrcp.pop %v1110
    %v1161 = vmul.f32 %v1062, %v1160
    %v1162 = vrcp.pop %v1111
    %v1163 = vmul.f32 %v1063, %v1162
    %v1164 = vrcp.pop %v1112
    %v1165 = vmul.f32 %v1064, %v1164
    %v1166 = vrcp.pop %v1113
    %v1167 = vmul.f32 %v1065, %v1166
    %v1168 = vrcp.pop %v1114
    %v1169 = vmul.f32 %v1066, %v1168
    %v1170 = vrcp.pop %v1115
    %v1171 = vmul.f32 %v1067, %v1170
    %v1172 = vrcp.pop %v1116
    %v1173 = vmul.f32 %v1068, %v1172
    %v1174 = vrcp.pop %v1117
    %v1175 = vmul.f32 %v1069, %v1174
    %v1176 = vrcp.pop %v1118
    %v1177 = vmul.f32 %v1070, %v1176
    %v1178 = vrcp.pop %v1119
    %v1179 = vmul.f32 %v1071, %v1178
    %v1180 = vrcp.pop %v1120
    %v1181 = vmul.f32 %v1072, %v1180
    %v1182 = vrcp.pop %v1121
    %v1183 = vmul.f32 %v1073, %v1182
    %v1184 = vrcp.pop %v1122
    %v1185 = vmul.f32 %v1074, %v1184
    %v1186 = vrcp.pop %v1123
    %v1187 = vmul.f32 %v1075, %v1186
    %v1188 = vrcp.pop %v1124
    %v1189 = vmul.f32 %v1076, %v1188
    %v1190 = vrcp.pop %v1125
    %v1191 = vmul.f32 %v1077, %v1190
    %v1192 = vrcp.pop %v1126
    %v1193 = vmul.f32 %v1078, %v1192
    %v1194 = vrcp.pop %v1127
    %v1195 = vmul.f32 %v1079, %v1194
    %v1196 = vrcp.pop %v1128
    %v1197 = vmul.f32 %v1080, %v1196
    %v1198 = vrcp.pop %v1129
    %v1199 = vmul.f32 %v1081, %v1198
    %v1200 = vrcp.pop %v1130
    %v1201 = vmul.f32 %v1082, %v1200
    %v1202 = vrcp.pop %v1131
    %v1203 = vmul.f32 %v1083, %v1202
    %v1204 = vrcp.pop %v1132
    %v1205 = vmul.f32 %v1084, %v1204
    %v1206 = vrcp.pop %v1133
    %v1207 = vmul.f32 %v1085, %v1206
    %v1208 = vrcp.pop %v1134
    %v1209 = vmul.f32 %v1086, %v1208
    %v1210 = vrcp.pop %v1135
    %v1211 = vmul.f32 %v1087, %v1210
    %v1212 = vrcp.pop %v1136
    %v1213 = vmul.f32 %v1088, %v1212
    %v1214 = vrcp.pop %v1137
    %v1215 = vmul.f32 %v1089, %v1214
    %v1216 = vrcp.pop %v1138
    %v1217 = vmul.f32 %v1090, %v1216
    %v1218 = vrcp.pop %v1139
    %v1219 = vmul.f32 %v1091, %v1218
    %v1220 = vrcp.pop %v1140
    %v1221 = vmul.f32 %v1092, %v1220
    %v1222 = vrcp.pop %v1141
    %v1223 = vmul.f32 %v1093, %v1222
    %v1224 = vrcp.pop %v1142
    %v1225 = vmul.f32 %v1094, %v1224
    %v1226 = vrcp.pop %v1143
    %v1227 = vmul.f32 %v1095, %v1226
    %v1228 = vrcp.pop %v1144
    %v1229 = vmul.f32 %v1096, %v1228
    %v1230 = vrcp.pop %v1145
    %v1231 = vmul.f32 %v1097, %v1230
    %v1232 = vrcp.pop %v1146
    %v1233 = vmul.f32 %v1098, %v1232
    %v1234 = vrcp.pop %v1147
    %v1235 = vmul.f32 %v1099, %v1234
    %v1236 = vrcp.pop %v1148
    %v1237 = vmul.f32 %v1100, %v1236
    %v1238 = vrcp.pop %v1149
    %v1239 = vmul.f32 %v1101, %v1238
    %v1240 = vrcp.pop %v1150
    %v1241 = vmul.f32 %v1102, %v1240
    %v1242 = vrcp.pop %v1151
    %v1243 = vmul.f32 %v1103, %v1242
    %v1244 = vrcp.pop %v1152
    %v1245 = vmul.f32 %v1104, %v1244
    %v1246 = vrcp.pop %v1153
    %v1247 = vmul.f32 %v1105, %v1246
    %v1248 = vrcp.pop %v1154
    %v1249 = vmul.f32 %v1106, %v1248
    %v1250 = vrcp.pop %v1155
    %v1251 = vmul.f32 %v1107, %v1250
    %v1252 = vmax.f32 %v1157, 1e-08
    %v1253 = vmax.f32 %v1159, 1e-08
    %v1254 = vmax.f32 %v1161, 1e-08
    %v1255 = vmax.f32 %v1163, 1e-08
    %v1256 = vmax.f32 %v1165, 1e-08
    %v1257 = vmax.f32 %v1167, 1e-08
    %v1258 = vmax.f32 %v1169, 1e-08
    %v1259 = vmax.f32 %v1171, 1e-08
    %v1260 = vmax.f32 %v1173, 1e-08
    %v1261 = vmax.f32 %v1175, 1e-08
    %v1262 = vmax.f32 %v1177, 1e-08
    %v1263 = vmax.f32 %v1179, 1e-08
    %v1264 = vmax.f32 %v1181, 1e-08
    %v1265 = vmax.f32 %v1183, 1e-08
    %v1266 = vmax.f32 %v1185, 1e-08
    %v1267 = vmax.f32 %v1187, 1e-08
    %v1268 = vmax.f32 %v1189, 1e-08
    %v1269 = vmax.f32 %v1191, 1e-08
    %v1270 = vmax.f32 %v1193, 1e-08
    %v1271 = vmax.f32 %v1195, 1e-08
    %v1272 = vmax.f32 %v1197, 1e-08
    %v1273 = vmax.f32 %v1199, 1e-08
    %v1274 = vmax.f32 %v1201, 1e-08
    %v1275 = vmax.f32 %v1203, 1e-08
    %v1276 = vmax.f32 %v1205, 1e-08
    %v1277 = vmax.f32 %v1207, 1e-08
    %v1278 = vmax.f32 %v1209, 1e-08
    %v1279 = vmax.f32 %v1211, 1e-08
    %v1280 = vmax.f32 %v1213, 1e-08
    %v1281 = vmax.f32 %v1215, 1e-08
    %v1282 = vmax.f32 %v1217, 1e-08
    %v1283 = vmax.f32 %v1219, 1e-08
    %v1284 = vmax.f32 %v1221, 1e-08
    %v1285 = vmax.f32 %v1223, 1e-08
    %v1286 = vmax.f32 %v1225, 1e-08
    %v1287 = vmax.f32 %v1227, 1e-08
    %v1288 = vmax.f32 %v1229, 1e-08
    %v1289 = vmax.f32 %v1231, 1e-08
    %v1290 = vmax.f32 %v1233, 1e-08
    %v1291 = vmax.f32 %v1235, 1e-08
    %v1292 = vmax.f32 %v1237, 1e-08
    %v1293 = vmax.f32 %v1239, 1e-08
    %v1294 = vmax.f32 %v1241, 1e-08
    %v1295 = vmax.f32 %v1243, 1e-08
    %v1296 = vmax.f32 %v1245, 1e-08
    %v1297 = vmax.f32 %v1247, 1e-08
    %v1298 = vmax.f32 %v1249, 1e-08
    %v1299 = vmax.f32 %v1251, 1e-08
    %v1300 = vrsqrt.pop %v1252
    %v1301 = vmul.f32 %v1252, %v1300
    %vm1302 = vcmp.eq.f32.partialorder %v1252, inf
    %v1303 = vsel %vm1302, %v1252, %v1301
    %vm1304 = vcmp.eq.f32.partialorder %v1252, 0.0
    %v1305 = vand.u32 %v1252, 2147483648
    %v1306 = vsel %vm1304, %v1305, %v1303
    %v1307 = vrsqrt.pop %v1253
    %v1308 = vmul.f32 %v1253, %v1307
    %vm1309 = vcmp.eq.f32.partialorder %v1253, inf
    %v1310 = vsel %vm1309, %v1253, %v1308
    %vm1311 = vcmp.eq.f32.partialorder %v1253, 0.0
    %v1312 = vand.u32 %v1253, 2147483648
    %v1313 = vsel %vm1311, %v1312, %v1310
    %v1314 = vrsqrt.pop %v1254
    %v1315 = vmul.f32 %v1254, %v1314
    %vm1316 = vcmp.eq.f32.partialorder %v1254, inf
    %v1317 = vsel %vm1316, %v1254, %v1315
    %vm1318 = vcmp.eq.f32.partialorder %v1254, 0.0
    %v1319 = vand.u32 %v1254, 2147483648
    %v1320 = vsel %vm1318, %v1319, %v1317
    %v1321 = vrsqrt.pop %v1255
    %v1322 = vmul.f32 %v1255, %v1321
    %vm1323 = vcmp.eq.f32.partialorder %v1255, inf
    %v1324 = vsel %vm1323, %v1255, %v1322
    %vm1325 = vcmp.eq.f32.partialorder %v1255, 0.0
    %v1326 = vand.u32 %v1255, 2147483648
    %v1327 = vsel %vm1325, %v1326, %v1324
    %v1328 = vrsqrt.pop %v1256
    %v1329 = vmul.f32 %v1256, %v1328
    %vm1330 = vcmp.eq.f32.partialorder %v1256, inf
    %v1331 = vsel %vm1330, %v1256, %v1329
    %vm1332 = vcmp.eq.f32.partialorder %v1256, 0.0
    %v1333 = vand.u32 %v1256, 2147483648
    %v1334 = vsel %vm1332, %v1333, %v1331
    %v1335 = vrsqrt.pop %v1257
    %v1336 = vmul.f32 %v1257, %v1335
    %vm1337 = vcmp.eq.f32.partialorder %v1257, inf
    %v1338 = vsel %vm1337, %v1257, %v1336
    %vm1339 = vcmp.eq.f32.partialorder %v1257, 0.0
    %v1340 = vand.u32 %v1257, 2147483648
    %v1341 = vsel %vm1339, %v1340, %v1338
    %v1342 = vrsqrt.pop %v1258
    %v1343 = vmul.f32 %v1258, %v1342
    %vm1344 = vcmp.eq.f32.partialorder %v1258, inf
    %v1345 = vsel %vm1344, %v1258, %v1343
    %vm1346 = vcmp.eq.f32.partialorder %v1258, 0.0
    %v1347 = vand.u32 %v1258, 2147483648
    %v1348 = vsel %vm1346, %v1347, %v1345
    %v1349 = vrsqrt.pop %v1259
    %v1350 = vmul.f32 %v1259, %v1349
    %vm1351 = vcmp.eq.f32.partialorder %v1259, inf
    %v1352 = vsel %vm1351, %v1259, %v1350
    %vm1353 = vcmp.eq.f32.partialorder %v1259, 0.0
    %v1354 = vand.u32 %v1259, 2147483648
    %v1355 = vsel %vm1353, %v1354, %v1352
    %v1356 = vrsqrt.pop %v1260
    %v1357 = vmul.f32 %v1260, %v1356
    %vm1358 = vcmp.eq.f32.partialorder %v1260, inf
    %v1359 = vsel %vm1358, %v1260, %v1357
    %vm1360 = vcmp.eq.f32.partialorder %v1260, 0.0
    %v1361 = vand.u32 %v1260, 2147483648
    %v1362 = vsel %vm1360, %v1361, %v1359
    %v1363 = vrsqrt.pop %v1261
    %v1364 = vmul.f32 %v1261, %v1363
    %vm1365 = vcmp.eq.f32.partialorder %v1261, inf
    %v1366 = vsel %vm1365, %v1261, %v1364
    %vm1367 = vcmp.eq.f32.partialorder %v1261, 0.0
    %v1368 = vand.u32 %v1261, 2147483648
    %v1369 = vsel %vm1367, %v1368, %v1366
    %v1370 = vrsqrt.pop %v1262
    %v1371 = vmul.f32 %v1262, %v1370
    %vm1372 = vcmp.eq.f32.partialorder %v1262, inf
    %v1373 = vsel %vm1372, %v1262, %v1371
    %vm1374 = vcmp.eq.f32.partialorder %v1262, 0.0
    %v1375 = vand.u32 %v1262, 2147483648
    %v1376 = vsel %vm1374, %v1375, %v1373
    %v1377 = vrsqrt.pop %v1263
    %v1378 = vmul.f32 %v1263, %v1377
    %vm1379 = vcmp.eq.f32.partialorder %v1263, inf
    %v1380 = vsel %vm1379, %v1263, %v1378
    %vm1381 = vcmp.eq.f32.partialorder %v1263, 0.0
    %v1382 = vand.u32 %v1263, 2147483648
    %v1383 = vsel %vm1381, %v1382, %v1380
    %v1384 = vrsqrt.pop %v1264
    %v1385 = vmul.f32 %v1264, %v1384
    %vm1386 = vcmp.eq.f32.partialorder %v1264, inf
    %v1387 = vsel %vm1386, %v1264, %v1385
    %vm1388 = vcmp.eq.f32.partialorder %v1264, 0.0
    %v1389 = vand.u32 %v1264, 2147483648
    %v1390 = vsel %vm1388, %v1389, %v1387
    %v1391 = vrsqrt.pop %v1265
    %v1392 = vmul.f32 %v1265, %v1391
    %vm1393 = vcmp.eq.f32.partialorder %v1265, inf
    %v1394 = vsel %vm1393, %v1265, %v1392
    %vm1395 = vcmp.eq.f32.partialorder %v1265, 0.0
    %v1396 = vand.u32 %v1265, 2147483648
    %v1397 = vsel %vm1395, %v1396, %v1394
    %v1398 = vrsqrt.pop %v1266
    %v1399 = vmul.f32 %v1266, %v1398
    %vm1400 = vcmp.eq.f32.partialorder %v1266, inf
    %v1401 = vsel %vm1400, %v1266, %v1399
    %vm1402 = vcmp.eq.f32.partialorder %v1266, 0.0
    %v1403 = vand.u32 %v1266, 2147483648
    %v1404 = vsel %vm1402, %v1403, %v1401
    %v1405 = vrsqrt.pop %v1267
    %v1406 = vmul.f32 %v1267, %v1405
    %vm1407 = vcmp.eq.f32.partialorder %v1267, inf
    %v1408 = vsel %vm1407, %v1267, %v1406
    %vm1409 = vcmp.eq.f32.partialorder %v1267, 0.0
    %v1410 = vand.u32 %v1267, 2147483648
    %v1411 = vsel %vm1409, %v1410, %v1408
    %v1412 = vrsqrt.pop %v1268
    %v1413 = vmul.f32 %v1268, %v1412
    %vm1414 = vcmp.eq.f32.partialorder %v1268, inf
    %v1415 = vsel %vm1414, %v1268, %v1413
    %vm1416 = vcmp.eq.f32.partialorder %v1268, 0.0
    %v1417 = vand.u32 %v1268, 2147483648
    %v1418 = vsel %vm1416, %v1417, %v1415
    %v1419 = vrsqrt.pop %v1269
    %v1420 = vmul.f32 %v1269, %v1419
    %vm1421 = vcmp.eq.f32.partialorder %v1269, inf
    %v1422 = vsel %vm1421, %v1269, %v1420
    %vm1423 = vcmp.eq.f32.partialorder %v1269, 0.0
    %v1424 = vand.u32 %v1269, 2147483648
    %v1425 = vsel %vm1423, %v1424, %v1422
    %v1426 = vrsqrt.pop %v1270
    %v1427 = vmul.f32 %v1270, %v1426
    %vm1428 = vcmp.eq.f32.partialorder %v1270, inf
    %v1429 = vsel %vm1428, %v1270, %v1427
    %vm1430 = vcmp.eq.f32.partialorder %v1270, 0.0
    %v1431 = vand.u32 %v1270, 2147483648
    %v1432 = vsel %vm1430, %v1431, %v1429
    %v1433 = vrsqrt.pop %v1271
    %v1434 = vmul.f32 %v1271, %v1433
    %vm1435 = vcmp.eq.f32.partialorder %v1271, inf
    %v1436 = vsel %vm1435, %v1271, %v1434
    %vm1437 = vcmp.eq.f32.partialorder %v1271, 0.0
    %v1438 = vand.u32 %v1271, 2147483648
    %v1439 = vsel %vm1437, %v1438, %v1436
    %v1440 = vrsqrt.pop %v1272
    %v1441 = vmul.f32 %v1272, %v1440
    %vm1442 = vcmp.eq.f32.partialorder %v1272, inf
    %v1443 = vsel %vm1442, %v1272, %v1441
    %vm1444 = vcmp.eq.f32.partialorder %v1272, 0.0
    %v1445 = vand.u32 %v1272, 2147483648
    %v1446 = vsel %vm1444, %v1445, %v1443
    %v1447 = vrsqrt.pop %v1273
    %v1448 = vmul.f32 %v1273, %v1447
    %vm1449 = vcmp.eq.f32.partialorder %v1273, inf
    %v1450 = vsel %vm1449, %v1273, %v1448
    %vm1451 = vcmp.eq.f32.partialorder %v1273, 0.0
    %v1452 = vand.u32 %v1273, 2147483648
    %v1453 = vsel %vm1451, %v1452, %v1450
    %v1454 = vrsqrt.pop %v1274
    %v1455 = vmul.f32 %v1274, %v1454
    %vm1456 = vcmp.eq.f32.partialorder %v1274, inf
    %v1457 = vsel %vm1456, %v1274, %v1455
    %vm1458 = vcmp.eq.f32.partialorder %v1274, 0.0
    %v1459 = vand.u32 %v1274, 2147483648
    %v1460 = vsel %vm1458, %v1459, %v1457
    %v1461 = vrsqrt.pop %v1275
    %v1462 = vmul.f32 %v1275, %v1461
    %vm1463 = vcmp.eq.f32.partialorder %v1275, inf
    %v1464 = vsel %vm1463, %v1275, %v1462
    %vm1465 = vcmp.eq.f32.partialorder %v1275, 0.0
    %v1466 = vand.u32 %v1275, 2147483648
    %v1467 = vsel %vm1465, %v1466, %v1464
    %v1468 = vrsqrt.pop %v1276
    %v1469 = vmul.f32 %v1276, %v1468
    %vm1470 = vcmp.eq.f32.partialorder %v1276, inf
    %v1471 = vsel %vm1470, %v1276, %v1469
    %vm1472 = vcmp.eq.f32.partialorder %v1276, 0.0
    %v1473 = vand.u32 %v1276, 2147483648
    %v1474 = vsel %vm1472, %v1473, %v1471
    %v1475 = vrsqrt.pop %v1277
    %v1476 = vmul.f32 %v1277, %v1475
    %vm1477 = vcmp.eq.f32.partialorder %v1277, inf
    %v1478 = vsel %vm1477, %v1277, %v1476
    %vm1479 = vcmp.eq.f32.partialorder %v1277, 0.0
    %v1480 = vand.u32 %v1277, 2147483648
    %v1481 = vsel %vm1479, %v1480, %v1478
    %v1482 = vrsqrt.pop %v1278
    %v1483 = vmul.f32 %v1278, %v1482
    %vm1484 = vcmp.eq.f32.partialorder %v1278, inf
    %v1485 = vsel %vm1484, %v1278, %v1483
    %vm1486 = vcmp.eq.f32.partialorder %v1278, 0.0
    %v1487 = vand.u32 %v1278, 2147483648
    %v1488 = vsel %vm1486, %v1487, %v1485
    %v1489 = vrsqrt.pop %v1279
    %v1490 = vmul.f32 %v1279, %v1489
    %vm1491 = vcmp.eq.f32.partialorder %v1279, inf
    %v1492 = vsel %vm1491, %v1279, %v1490
    %vm1493 = vcmp.eq.f32.partialorder %v1279, 0.0
    %v1494 = vand.u32 %v1279, 2147483648
    %v1495 = vsel %vm1493, %v1494, %v1492
    %v1496 = vrsqrt.pop %v1280
    %v1497 = vmul.f32 %v1280, %v1496
    %vm1498 = vcmp.eq.f32.partialorder %v1280, inf
    %v1499 = vsel %vm1498, %v1280, %v1497
    %vm1500 = vcmp.eq.f32.partialorder %v1280, 0.0
    %v1501 = vand.u32 %v1280, 2147483648
    %v1502 = vsel %vm1500, %v1501, %v1499
    %v1503 = vrsqrt.pop %v1281
    %v1504 = vmul.f32 %v1281, %v1503
    %vm1505 = vcmp.eq.f32.partialorder %v1281, inf
    %v1506 = vsel %vm1505, %v1281, %v1504
    %vm1507 = vcmp.eq.f32.partialorder %v1281, 0.0
    %v1508 = vand.u32 %v1281, 2147483648
    %v1509 = vsel %vm1507, %v1508, %v1506
    %v1510 = vrsqrt.pop %v1282
    %v1511 = vmul.f32 %v1282, %v1510
    %vm1512 = vcmp.eq.f32.partialorder %v1282, inf
    %v1513 = vsel %vm1512, %v1282, %v1511
    %vm1514 = vcmp.eq.f32.partialorder %v1282, 0.0
    %v1515 = vand.u32 %v1282, 2147483648
    %v1516 = vsel %vm1514, %v1515, %v1513
    %v1517 = vrsqrt.pop %v1283
    %v1518 = vmul.f32 %v1283, %v1517
    %vm1519 = vcmp.eq.f32.partialorder %v1283, inf
    %v1520 = vsel %vm1519, %v1283, %v1518
    %vm1521 = vcmp.eq.f32.partialorder %v1283, 0.0
    %v1522 = vand.u32 %v1283, 2147483648
    %v1523 = vsel %vm1521, %v1522, %v1520
    %v1524 = vrsqrt.pop %v1284
    %v1525 = vmul.f32 %v1284, %v1524
    %vm1526 = vcmp.eq.f32.partialorder %v1284, inf
    %v1527 = vsel %vm1526, %v1284, %v1525
    %vm1528 = vcmp.eq.f32.partialorder %v1284, 0.0
    %v1529 = vand.u32 %v1284, 2147483648
    %v1530 = vsel %vm1528, %v1529, %v1527
    %v1531 = vrsqrt.pop %v1285
    %v1532 = vmul.f32 %v1285, %v1531
    %vm1533 = vcmp.eq.f32.partialorder %v1285, inf
    %v1534 = vsel %vm1533, %v1285, %v1532
    %vm1535 = vcmp.eq.f32.partialorder %v1285, 0.0
    %v1536 = vand.u32 %v1285, 2147483648
    %v1537 = vsel %vm1535, %v1536, %v1534
    %v1538 = vrsqrt.pop %v1286
    %v1539 = vmul.f32 %v1286, %v1538
    %vm1540 = vcmp.eq.f32.partialorder %v1286, inf
    %v1541 = vsel %vm1540, %v1286, %v1539
    %vm1542 = vcmp.eq.f32.partialorder %v1286, 0.0
    %v1543 = vand.u32 %v1286, 2147483648
    %v1544 = vsel %vm1542, %v1543, %v1541
    %v1545 = vrsqrt.pop %v1287
    %v1546 = vmul.f32 %v1287, %v1545
    %vm1547 = vcmp.eq.f32.partialorder %v1287, inf
    %v1548 = vsel %vm1547, %v1287, %v1546
    %vm1549 = vcmp.eq.f32.partialorder %v1287, 0.0
    %v1550 = vand.u32 %v1287, 2147483648
    %v1551 = vsel %vm1549, %v1550, %v1548
    %v1552 = vrsqrt.pop %v1288
    %v1553 = vmul.f32 %v1288, %v1552
    %vm1554 = vcmp.eq.f32.partialorder %v1288, inf
    %v1555 = vsel %vm1554, %v1288, %v1553
    %vm1556 = vcmp.eq.f32.partialorder %v1288, 0.0
    %v1557 = vand.u32 %v1288, 2147483648
    %v1558 = vsel %vm1556, %v1557, %v1555
    %v1559 = vrsqrt.pop %v1289
    %v1560 = vmul.f32 %v1289, %v1559
    %vm1561 = vcmp.eq.f32.partialorder %v1289, inf
    %v1562 = vsel %vm1561, %v1289, %v1560
    %vm1563 = vcmp.eq.f32.partialorder %v1289, 0.0
    %v1564 = vand.u32 %v1289, 2147483648
    %v1565 = vsel %vm1563, %v1564, %v1562
    %v1566 = vrsqrt.pop %v1290
    %v1567 = vmul.f32 %v1290, %v1566
    %vm1568 = vcmp.eq.f32.partialorder %v1290, inf
    %v1569 = vsel %vm1568, %v1290, %v1567
    %vm1570 = vcmp.eq.f32.partialorder %v1290, 0.0
    %v1571 = vand.u32 %v1290, 2147483648
    %v1572 = vsel %vm1570, %v1571, %v1569
    %v1573 = vrsqrt.pop %v1291
    %v1574 = vmul.f32 %v1291, %v1573
    %vm1575 = vcmp.eq.f32.partialorder %v1291, inf
    %v1576 = vsel %vm1575, %v1291, %v1574
    %vm1577 = vcmp.eq.f32.partialorder %v1291, 0.0
    %v1578 = vand.u32 %v1291, 2147483648
    %v1579 = vsel %vm1577, %v1578, %v1576
    %v1580 = vrsqrt.pop %v1292
    %v1581 = vmul.f32 %v1292, %v1580
    %vm1582 = vcmp.eq.f32.partialorder %v1292, inf
    %v1583 = vsel %vm1582, %v1292, %v1581
    %vm1584 = vcmp.eq.f32.partialorder %v1292, 0.0
    %v1585 = vand.u32 %v1292, 2147483648
    %v1586 = vsel %vm1584, %v1585, %v1583
    %v1587 = vrsqrt.pop %v1293
    %v1588 = vmul.f32 %v1293, %v1587
    %vm1589 = vcmp.eq.f32.partialorder %v1293, inf
    %v1590 = vsel %vm1589, %v1293, %v1588
    %vm1591 = vcmp.eq.f32.partialorder %v1293, 0.0
    %v1592 = vand.u32 %v1293, 2147483648
    %v1593 = vsel %vm1591, %v1592, %v1590
    %v1594 = vrsqrt.pop %v1294
    %v1595 = vmul.f32 %v1294, %v1594
    %vm1596 = vcmp.eq.f32.partialorder %v1294, inf
    %v1597 = vsel %vm1596, %v1294, %v1595
    %vm1598 = vcmp.eq.f32.partialorder %v1294, 0.0
    %v1599 = vand.u32 %v1294, 2147483648
    %v1600 = vsel %vm1598, %v1599, %v1597
    %v1601 = vrsqrt.pop %v1295
    %v1602 = vmul.f32 %v1295, %v1601
    %vm1603 = vcmp.eq.f32.partialorder %v1295, inf
    %v1604 = vsel %vm1603, %v1295, %v1602
    %vm1605 = vcmp.eq.f32.partialorder %v1295, 0.0
    %v1606 = vand.u32 %v1295, 2147483648
    %v1607 = vsel %vm1605, %v1606, %v1604
    %v1608 = vrsqrt.pop %v1296
    %v1609 = vmul.f32 %v1296, %v1608
    %vm1610 = vcmp.eq.f32.partialorder %v1296, inf
    %v1611 = vsel %vm1610, %v1296, %v1609
    %vm1612 = vcmp.eq.f32.partialorder %v1296, 0.0
    %v1613 = vand.u32 %v1296, 2147483648
    %v1614 = vsel %vm1612, %v1613, %v1611
    %v1615 = vrsqrt.pop %v1297
    %v1616 = vmul.f32 %v1297, %v1615
    %vm1617 = vcmp.eq.f32.partialorder %v1297, inf
    %v1618 = vsel %vm1617, %v1297, %v1616
    %vm1619 = vcmp.eq.f32.partialorder %v1297, 0.0
    %v1620 = vand.u32 %v1297, 2147483648
    %v1621 = vsel %vm1619, %v1620, %v1618
    %v1622 = vrsqrt.pop %v1298
    %v1623 = vmul.f32 %v1298, %v1622
    %vm1624 = vcmp.eq.f32.partialorder %v1298, inf
    %v1625 = vsel %vm1624, %v1298, %v1623
    %vm1626 = vcmp.eq.f32.partialorder %v1298, 0.0
    %v1627 = vand.u32 %v1298, 2147483648
    %v1628 = vsel %vm1626, %v1627, %v1625
    %v1629 = vrsqrt.pop %v1299
    %v1630 = vmul.f32 %v1299, %v1629
    %vm1631 = vcmp.eq.f32.partialorder %v1299, inf
    %v1632 = vsel %vm1631, %v1299, %v1630
    %vm1633 = vcmp.eq.f32.partialorder %v1299, 0.0
    %v1634 = vand.u32 %v1299, 2147483648
    %v1635 = vsel %vm1633, %v1634, %v1632
    %1637 = vset.pattern.permute.xlu0 0
    %1638 = vperm.xlu0 %1637, %v1306
    %v1639 = vpop.permute.xlu0 %1638
    %1642 = vset.pattern.permute.xlu0 0
    %1643 = vperm.xlu0 %1642, %v1313
    %v1644 = vpop.permute.xlu0 %1643
    %1647 = vset.pattern.permute.xlu0 0
    %1648 = vperm.xlu0 %1647, %v1320
    %v1649 = vpop.permute.xlu0 %1648
    %1652 = vset.pattern.permute.xlu0 0
    %1653 = vperm.xlu0 %1652, %v1327
    %v1654 = vpop.permute.xlu0 %1653
    %1657 = vset.pattern.permute.xlu0 0
    %1658 = vperm.xlu0 %1657, %v1334
    %v1659 = vpop.permute.xlu0 %1658
    %1662 = vset.pattern.permute.xlu0 0
    %1663 = vperm.xlu0 %1662, %v1341
    %v1664 = vpop.permute.xlu0 %1663
    %1667 = vset.pattern.permute.xlu0 0
    %1668 = vperm.xlu0 %1667, %v1348
    %v1669 = vpop.permute.xlu0 %1668
    %1672 = vset.pattern.permute.xlu0 0
    %1673 = vperm.xlu0 %1672, %v1355
    %v1674 = vpop.permute.xlu0 %1673
    %1677 = vset.pattern.permute.xlu0 0
    %1678 = vperm.xlu0 %1677, %v1362
    %v1679 = vpop.permute.xlu0 %1678
    %1682 = vset.pattern.permute.xlu0 0
    %1683 = vperm.xlu0 %1682, %v1369
    %v1684 = vpop.permute.xlu0 %1683
    %1687 = vset.pattern.permute.xlu0 0
    %1688 = vperm.xlu0 %1687, %v1376
    %v1689 = vpop.permute.xlu0 %1688
    %1692 = vset.pattern.permute.xlu0 0
    %1693 = vperm.xlu0 %1692, %v1383
    %v1694 = vpop.permute.xlu0 %1693
    %1697 = vset.pattern.permute.xlu0 0
    %1698 = vperm.xlu0 %1697, %v1390
    %v1699 = vpop.permute.xlu0 %1698
    %1702 = vset.pattern.permute.xlu0 0
    %1703 = vperm.xlu0 %1702, %v1397
    %v1704 = vpop.permute.xlu0 %1703
    %1707 = vset.pattern.permute.xlu0 0
    %1708 = vperm.xlu0 %1707, %v1404
    %v1709 = vpop.permute.xlu0 %1708
    %1712 = vset.pattern.permute.xlu0 0
    %1713 = vperm.xlu0 %1712, %v1411
    %v1714 = vpop.permute.xlu0 %1713
    %1717 = vset.pattern.permute.xlu0 0
    %1718 = vperm.xlu0 %1717, %v1418
    %v1719 = vpop.permute.xlu0 %1718
    %1722 = vset.pattern.permute.xlu0 0
    %1723 = vperm.xlu0 %1722, %v1425
    %v1724 = vpop.permute.xlu0 %1723
    %1727 = vset.pattern.permute.xlu0 0
    %1728 = vperm.xlu0 %1727, %v1432
    %v1729 = vpop.permute.xlu0 %1728
    %1732 = vset.pattern.permute.xlu0 0
    %1733 = vperm.xlu0 %1732, %v1439
    %v1734 = vpop.permute.xlu0 %1733
    %1737 = vset.pattern.permute.xlu0 0
    %1738 = vperm.xlu0 %1737, %v1446
    %v1739 = vpop.permute.xlu0 %1738
    %1742 = vset.pattern.permute.xlu0 0
    %1743 = vperm.xlu0 %1742, %v1453
    %v1744 = vpop.permute.xlu0 %1743
    %1747 = vset.pattern.permute.xlu0 0
    %1748 = vperm.xlu0 %1747, %v1460
    %v1749 = vpop.permute.xlu0 %1748
    %1752 = vset.pattern.permute.xlu0 0
    %1753 = vperm.xlu0 %1752, %v1467
    %v1754 = vpop.permute.xlu0 %1753
    %1757 = vset.pattern.permute.xlu0 0
    %1758 = vperm.xlu0 %1757, %v1474
    %v1759 = vpop.permute.xlu0 %1758
    %1762 = vset.pattern.permute.xlu0 0
    %1763 = vperm.xlu0 %1762, %v1481
    %v1764 = vpop.permute.xlu0 %1763
    %1767 = vset.pattern.permute.xlu0 0
    %1768 = vperm.xlu0 %1767, %v1488
    %v1769 = vpop.permute.xlu0 %1768
    %1772 = vset.pattern.permute.xlu0 0
    %1773 = vperm.xlu0 %1772, %v1495
    %v1774 = vpop.permute.xlu0 %1773
    %1777 = vset.pattern.permute.xlu0 0
    %1778 = vperm.xlu0 %1777, %v1502
    %v1779 = vpop.permute.xlu0 %1778
    %1782 = vset.pattern.permute.xlu0 0
    %1783 = vperm.xlu0 %1782, %v1509
    %v1784 = vpop.permute.xlu0 %1783
    %1787 = vset.pattern.permute.xlu0 0
    %1788 = vperm.xlu0 %1787, %v1516
    %v1789 = vpop.permute.xlu0 %1788
    %1792 = vset.pattern.permute.xlu0 0
    %1793 = vperm.xlu0 %1792, %v1523
    %v1794 = vpop.permute.xlu0 %1793
    %1797 = vset.pattern.permute.xlu0 0
    %1798 = vperm.xlu0 %1797, %v1530
    %v1799 = vpop.permute.xlu0 %1798
    %1802 = vset.pattern.permute.xlu0 0
    %1803 = vperm.xlu0 %1802, %v1537
    %v1804 = vpop.permute.xlu0 %1803
    %1807 = vset.pattern.permute.xlu0 0
    %1808 = vperm.xlu0 %1807, %v1544
    %v1809 = vpop.permute.xlu0 %1808
    %1812 = vset.pattern.permute.xlu0 0
    %1813 = vperm.xlu0 %1812, %v1551
    %v1814 = vpop.permute.xlu0 %1813
    %1817 = vset.pattern.permute.xlu0 0
    %1818 = vperm.xlu0 %1817, %v1558
    %v1819 = vpop.permute.xlu0 %1818
    %1822 = vset.pattern.permute.xlu0 0
    %1823 = vperm.xlu0 %1822, %v1565
    %v1824 = vpop.permute.xlu0 %1823
    %1827 = vset.pattern.permute.xlu0 0
    %1828 = vperm.xlu0 %1827, %v1572
    %v1829 = vpop.permute.xlu0 %1828
    %1832 = vset.pattern.permute.xlu0 0
    %1833 = vperm.xlu0 %1832, %v1579
    %v1834 = vpop.permute.xlu0 %1833
    %1837 = vset.pattern.permute.xlu0 0
    %1838 = vperm.xlu0 %1837, %v1586
    %v1839 = vpop.permute.xlu0 %1838
    %1842 = vset.pattern.permute.xlu0 0
    %1843 = vperm.xlu0 %1842, %v1593
    %v1844 = vpop.permute.xlu0 %1843
    %1847 = vset.pattern.permute.xlu0 0
    %1848 = vperm.xlu0 %1847, %v1600
    %v1849 = vpop.permute.xlu0 %1848
    %1852 = vset.pattern.permute.xlu0 0
    %1853 = vperm.xlu0 %1852, %v1607
    %v1854 = vpop.permute.xlu0 %1853
    %1857 = vset.pattern.permute.xlu0 0
    %1858 = vperm.xlu0 %1857, %v1614
    %v1859 = vpop.permute.xlu0 %1858
    %1862 = vset.pattern.permute.xlu0 0
    %1863 = vperm.xlu0 %1862, %v1621
    %v1864 = vpop.permute.xlu0 %1863
    %1867 = vset.pattern.permute.xlu0 0
    %1868 = vperm.xlu0 %1867, %v1628
    %v1869 = vpop.permute.xlu0 %1868
    %1872 = vset.pattern.permute.xlu0 0
    %1873 = vperm.xlu0 %1872, %v1635
    %v1874 = vpop.permute.xlu0 %1873
    %v1876 = vmul.f32 %v434, %v1639
    %v1877 = vmul.f32 %v435, %v1644
    %v1878 = vmul.f32 %v436, %v1649
    %v1879 = vmul.f32 %v437, %v1654
    %v1880 = vmul.f32 %v438, %v1659
    %v1881 = vmul.f32 %v439, %v1664
    %v1882 = vmul.f32 %v440, %v1669
    %v1883 = vmul.f32 %v441, %v1674
    %v1884 = vmul.f32 %v442, %v1679
    %v1885 = vmul.f32 %v443, %v1684
    %v1886 = vmul.f32 %v444, %v1689
    %v1887 = vmul.f32 %v445, %v1694
    %v1888 = vmul.f32 %v446, %v1699
    %v1889 = vmul.f32 %v447, %v1704
    %v1890 = vmul.f32 %v448, %v1709
    %v1891 = vmul.f32 %v449, %v1714
    %v1892 = vmul.f32 %v450, %v1719
    %v1893 = vmul.f32 %v451, %v1724
    %v1894 = vmul.f32 %v452, %v1729
    %v1895 = vmul.f32 %v453, %v1734
    %v1896 = vmul.f32 %v454, %v1739
    %v1897 = vmul.f32 %v455, %v1744
    %v1898 = vmul.f32 %v456, %v1749
    %v1899 = vmul.f32 %v457, %v1754
    %v1900 = vmul.f32 %v458, %v1759
    %v1901 = vmul.f32 %v459, %v1764
    %v1902 = vmul.f32 %v460, %v1769
    %v1903 = vmul.f32 %v461, %v1774
    %v1904 = vmul.f32 %v462, %v1779
    %v1905 = vmul.f32 %v463, %v1784
    %v1906 = vmul.f32 %v464, %v1789
    %v1907 = vmul.f32 %v465, %v1794
    %v1908 = vmul.f32 %v466, %v1799
    %v1909 = vmul.f32 %v467, %v1804
    %v1910 = vmul.f32 %v468, %v1809
    %v1911 = vmul.f32 %v469, %v1814
    %v1912 = vmul.f32 %v470, %v1819
    %v1913 = vmul.f32 %v471, %v1824
    %v1914 = vmul.f32 %v472, %v1829
    %v1915 = vmul.f32 %v473, %v1834
    %v1916 = vmul.f32 %v474, %v1839
    %v1917 = vmul.f32 %v475, %v1844
    %v1918 = vmul.f32 %v476, %v1849
    %v1919 = vmul.f32 %v477, %v1854
    %v1920 = vmul.f32 %v478, %v1859
    %v1921 = vmul.f32 %v479, %v1864
    %v1922 = vmul.f32 %v480, %v1869
    %v1923 = vmul.f32 %v481, %v1874
    %1925 = vset.pattern.permute.xlu0 0
    %1926 = vperm.xlu0 %1925, %v820
    %v1927 = vpop.permute.xlu0 %1926
    %1930 = vset.pattern.permute.xlu0 0
    %1931 = vperm.xlu0 %1930, %v821
    %v1932 = vpop.permute.xlu0 %1931
    %1935 = vset.pattern.permute.xlu0 0
    %1936 = vperm.xlu0 %1935, %v822
    %v1937 = vpop.permute.xlu0 %1936
    %1940 = vset.pattern.permute.xlu0 0
    %1941 = vperm.xlu0 %1940, %v823
    %v1942 = vpop.permute.xlu0 %1941
    %1945 = vset.pattern.permute.xlu0 0
    %1946 = vperm.xlu0 %1945, %v824
    %v1947 = vpop.permute.xlu0 %1946
    %1950 = vset.pattern.permute.xlu0 0
    %1951 = vperm.xlu0 %1950, %v825
    %v1952 = vpop.permute.xlu0 %1951
    %1955 = vset.pattern.permute.xlu0 0
    %1956 = vperm.xlu0 %1955, %v826
    %v1957 = vpop.permute.xlu0 %1956
    %1960 = vset.pattern.permute.xlu0 0
    %1961 = vperm.xlu0 %1960, %v827
    %v1962 = vpop.permute.xlu0 %1961
    %1965 = vset.pattern.permute.xlu0 0
    %1966 = vperm.xlu0 %1965, %v828
    %v1967 = vpop.permute.xlu0 %1966
    %1970 = vset.pattern.permute.xlu0 0
    %1971 = vperm.xlu0 %1970, %v829
    %v1972 = vpop.permute.xlu0 %1971
    %1975 = vset.pattern.permute.xlu0 0
    %1976 = vperm.xlu0 %1975, %v830
    %v1977 = vpop.permute.xlu0 %1976
    %1980 = vset.pattern.permute.xlu0 0
    %1981 = vperm.xlu0 %1980, %v831
    %v1982 = vpop.permute.xlu0 %1981
    %1985 = vset.pattern.permute.xlu0 0
    %1986 = vperm.xlu0 %1985, %v832
    %v1987 = vpop.permute.xlu0 %1986
    %1990 = vset.pattern.permute.xlu0 0
    %1991 = vperm.xlu0 %1990, %v833
    %v1992 = vpop.permute.xlu0 %1991
    %1995 = vset.pattern.permute.xlu0 0
    %1996 = vperm.xlu0 %1995, %v834
    %v1997 = vpop.permute.xlu0 %1996
    %2000 = vset.pattern.permute.xlu0 0
    %2001 = vperm.xlu0 %2000, %v835
    %v2002 = vpop.permute.xlu0 %2001
    %2005 = vset.pattern.permute.xlu0 0
    %2006 = vperm.xlu0 %2005, %v836
    %v2007 = vpop.permute.xlu0 %2006
    %2010 = vset.pattern.permute.xlu0 0
    %2011 = vperm.xlu0 %2010, %v837
    %v2012 = vpop.permute.xlu0 %2011
    %2015 = vset.pattern.permute.xlu0 0
    %2016 = vperm.xlu0 %2015, %v838
    %v2017 = vpop.permute.xlu0 %2016
    %2020 = vset.pattern.permute.xlu0 0
    %2021 = vperm.xlu0 %2020, %v839
    %v2022 = vpop.permute.xlu0 %2021
    %2025 = vset.pattern.permute.xlu0 0
    %2026 = vperm.xlu0 %2025, %v840
    %v2027 = vpop.permute.xlu0 %2026
    %2030 = vset.pattern.permute.xlu0 0
    %2031 = vperm.xlu0 %2030, %v841
    %v2032 = vpop.permute.xlu0 %2031
    %2035 = vset.pattern.permute.xlu0 0
    %2036 = vperm.xlu0 %2035, %v842
    %v2037 = vpop.permute.xlu0 %2036
    %2040 = vset.pattern.permute.xlu0 0
    %2041 = vperm.xlu0 %2040, %v843
    %v2042 = vpop.permute.xlu0 %2041
    %2045 = vset.pattern.permute.xlu0 0
    %2046 = vperm.xlu0 %2045, %v844
    %v2047 = vpop.permute.xlu0 %2046
    %2050 = vset.pattern.permute.xlu0 0
    %2051 = vperm.xlu0 %2050, %v845
    %v2052 = vpop.permute.xlu0 %2051
    %2055 = vset.pattern.permute.xlu0 0
    %2056 = vperm.xlu0 %2055, %v846
    %v2057 = vpop.permute.xlu0 %2056
    %2060 = vset.pattern.permute.xlu0 0
    %2061 = vperm.xlu0 %2060, %v847
    %v2062 = vpop.permute.xlu0 %2061
    %2065 = vset.pattern.permute.xlu0 0
    %2066 = vperm.xlu0 %2065, %v848
    %v2067 = vpop.permute.xlu0 %2066
    %2070 = vset.pattern.permute.xlu0 0
    %2071 = vperm.xlu0 %2070, %v849
    %v2072 = vpop.permute.xlu0 %2071
    %2075 = vset.pattern.permute.xlu0 0
    %2076 = vperm.xlu0 %2075, %v850
    %v2077 = vpop.permute.xlu0 %2076
    %2080 = vset.pattern.permute.xlu0 0
    %2081 = vperm.xlu0 %2080, %v851
    %v2082 = vpop.permute.xlu0 %2081
    %2085 = vset.pattern.permute.xlu0 0
    %2086 = vperm.xlu0 %2085, %v852
    %v2087 = vpop.permute.xlu0 %2086
    %2090 = vset.pattern.permute.xlu0 0
    %2091 = vperm.xlu0 %2090, %v853
    %v2092 = vpop.permute.xlu0 %2091
    %2095 = vset.pattern.permute.xlu0 0
    %2096 = vperm.xlu0 %2095, %v854
    %v2097 = vpop.permute.xlu0 %2096
    %2100 = vset.pattern.permute.xlu0 0
    %2101 = vperm.xlu0 %2100, %v855
    %v2102 = vpop.permute.xlu0 %2101
    %2105 = vset.pattern.permute.xlu0 0
    %2106 = vperm.xlu0 %2105, %v856
    %v2107 = vpop.permute.xlu0 %2106
    %2110 = vset.pattern.permute.xlu0 0
    %2111 = vperm.xlu0 %2110, %v857
    %v2112 = vpop.permute.xlu0 %2111
    %2115 = vset.pattern.permute.xlu0 0
    %2116 = vperm.xlu0 %2115, %v858
    %v2117 = vpop.permute.xlu0 %2116
    %2120 = vset.pattern.permute.xlu0 0
    %2121 = vperm.xlu0 %2120, %v859
    %v2122 = vpop.permute.xlu0 %2121
    %2125 = vset.pattern.permute.xlu0 0
    %2126 = vperm.xlu0 %2125, %v860
    %v2127 = vpop.permute.xlu0 %2126
    %2130 = vset.pattern.permute.xlu0 0
    %2131 = vperm.xlu0 %2130, %v861
    %v2132 = vpop.permute.xlu0 %2131
    %2135 = vset.pattern.permute.xlu0 0
    %2136 = vperm.xlu0 %2135, %v862
    %v2137 = vpop.permute.xlu0 %2136
    %2140 = vset.pattern.permute.xlu0 0
    %2141 = vperm.xlu0 %2140, %v863
    %v2142 = vpop.permute.xlu0 %2141
    %2145 = vset.pattern.permute.xlu0 0
    %2146 = vperm.xlu0 %2145, %v864
    %v2147 = vpop.permute.xlu0 %2146
    %2150 = vset.pattern.permute.xlu0 0
    %2151 = vperm.xlu0 %2150, %v865
    %v2152 = vpop.permute.xlu0 %2151
    %2155 = vset.pattern.permute.xlu0 0
    %2156 = vperm.xlu0 %2155, %v866
    %v2157 = vpop.permute.xlu0 %2156
    %2160 = vset.pattern.permute.xlu0 0
    %2161 = vperm.xlu0 %2160, %v867
    %v2162 = vpop.permute.xlu0 %2161
    %v2165 = vlaneseq
    %v2166 = vshrl.u32 %v2165, 7
    %v2167 = vsub.s32 0, %v2166
    %v2168 = vrot.slane %v426, %v2167
    %v2170 = vmul.f32 %v1927, %v2168
    %v2171 = vmul.f32 %v1932, %v2168
    %v2172 = vmul.f32 %v1937, %v2168
    %v2173 = vmul.f32 %v1942, %v2168
    %v2174 = vmul.f32 %v1947, %v2168
    %v2175 = vmul.f32 %v1952, %v2168
    %v2176 = vmul.f32 %v1957, %v2168
    %v2177 = vmul.f32 %v1962, %v2168
    %v2178 = vmul.f32 %v1967, %v2168
    %v2179 = vmul.f32 %v1972, %v2168
    %v2180 = vmul.f32 %v1977, %v2168
    %v2181 = vmul.f32 %v1982, %v2168
    %v2182 = vmul.f32 %v1987, %v2168
    %v2183 = vmul.f32 %v1992, %v2168
    %v2184 = vmul.f32 %v1997, %v2168
    %v2185 = vmul.f32 %v2002, %v2168
    %v2186 = vmul.f32 %v2007, %v2168
    %v2187 = vmul.f32 %v2012, %v2168
    %v2188 = vmul.f32 %v2017, %v2168
    %v2189 = vmul.f32 %v2022, %v2168
    %v2190 = vmul.f32 %v2027, %v2168
    %v2191 = vmul.f32 %v2032, %v2168
    %v2192 = vmul.f32 %v2037, %v2168
    %v2193 = vmul.f32 %v2042, %v2168
    %v2194 = vmul.f32 %v2047, %v2168
    %v2195 = vmul.f32 %v2052, %v2168
    %v2196 = vmul.f32 %v2057, %v2168
    %v2197 = vmul.f32 %v2062, %v2168
    %v2198 = vmul.f32 %v2067, %v2168
    %v2199 = vmul.f32 %v2072, %v2168
    %v2200 = vmul.f32 %v2077, %v2168
    %v2201 = vmul.f32 %v2082, %v2168
    %v2202 = vmul.f32 %v2087, %v2168
    %v2203 = vmul.f32 %v2092, %v2168
    %v2204 = vmul.f32 %v2097, %v2168
    %v2205 = vmul.f32 %v2102, %v2168
    %v2206 = vmul.f32 %v2107, %v2168
    %v2207 = vmul.f32 %v2112, %v2168
    %v2208 = vmul.f32 %v2117, %v2168
    %v2209 = vmul.f32 %v2122, %v2168
    %v2210 = vmul.f32 %v2127, %v2168
    %v2211 = vmul.f32 %v2132, %v2168
    %v2212 = vmul.f32 %v2137, %v2168
    %v2213 = vmul.f32 %v2142, %v2168
    %v2214 = vmul.f32 %v2147, %v2168
    %v2215 = vmul.f32 %v2152, %v2168
    %v2216 = vmul.f32 %v2157, %v2168
    %v2217 = vmul.f32 %v2162, %v2168
    %v2218 = vadd.f32 %v1876, %v2170
    %v2219 = vadd.f32 %v1877, %v2171
    %v2220 = vadd.f32 %v1878, %v2172
    %v2221 = vadd.f32 %v1879, %v2173
    %v2222 = vadd.f32 %v1880, %v2174
    %v2223 = vadd.f32 %v1881, %v2175
    %v2224 = vadd.f32 %v1882, %v2176
    %v2225 = vadd.f32 %v1883, %v2177
    %v2226 = vadd.f32 %v1884, %v2178
    %v2227 = vadd.f32 %v1885, %v2179
    %v2228 = vadd.f32 %v1886, %v2180
    %v2229 = vadd.f32 %v1887, %v2181
    %v2230 = vadd.f32 %v1888, %v2182
    %v2231 = vadd.f32 %v1889, %v2183
    %v2232 = vadd.f32 %v1890, %v2184
    %v2233 = vadd.f32 %v1891, %v2185
    %v2234 = vadd.f32 %v1892, %v2186
    %v2235 = vadd.f32 %v1893, %v2187
    %v2236 = vadd.f32 %v1894, %v2188
    %v2237 = vadd.f32 %v1895, %v2189
    %v2238 = vadd.f32 %v1896, %v2190
    %v2239 = vadd.f32 %v1897, %v2191
    %v2240 = vadd.f32 %v1898, %v2192
    %v2241 = vadd.f32 %v1899, %v2193
    %v2242 = vadd.f32 %v1900, %v2194
    %v2243 = vadd.f32 %v1901, %v2195
    %v2244 = vadd.f32 %v1902, %v2196
    %v2245 = vadd.f32 %v1903, %v2197
    %v2246 = vadd.f32 %v1904, %v2198
    %v2247 = vadd.f32 %v1905, %v2199
    %v2248 = vadd.f32 %v1906, %v2200
    %v2249 = vadd.f32 %v1907, %v2201
    %v2250 = vadd.f32 %v1908, %v2202
    %v2251 = vadd.f32 %v1909, %v2203
    %v2252 = vadd.f32 %v1910, %v2204
    %v2253 = vadd.f32 %v1911, %v2205
    %v2254 = vadd.f32 %v1912, %v2206
    %v2255 = vadd.f32 %v1913, %v2207
    %v2256 = vadd.f32 %v1914, %v2208
    %v2257 = vadd.f32 %v1915, %v2209
    %v2258 = vadd.f32 %v1916, %v2210
    %v2259 = vadd.f32 %v1917, %v2211
    %v2260 = vadd.f32 %v1918, %v2212
    %v2261 = vadd.f32 %v1919, %v2213
    %v2262 = vadd.f32 %v1920, %v2214
    %v2263 = vadd.f32 %v1921, %v2215
    %v2264 = vadd.f32 %v1922, %v2216
    %v2265 = vadd.f32 %v1923, %v2217
    %2266 = vst [vmem:[#allocation8] sm:$0xff] %v2218
    %2267 = vst [vmem:[#allocation8 + $0x8] sm:$0xff] %v2219
    %2268 = vst [vmem:[#allocation8 + $0x10] sm:$0xff] %v2220
    %2269 = vst [vmem:[#allocation8 + $0x18] sm:$0xff] %v2221
    %2270 = vst [vmem:[#allocation8 + $0x20] sm:$0xff] %v2222
    %2271 = vst [vmem:[#allocation8 + $0x28] sm:$0xff] %v2223
    %2272 = vst [vmem:[#allocation8 + $0x30] sm:$0xff] %v2224
    %2273 = vst [vmem:[#allocation8 + $0x38] sm:$0xff] %v2225
    %2274 = vst [vmem:[#allocation8 + $0x40] sm:$0xff] %v2226
    %2275 = vst [vmem:[#allocation8 + $0x48] sm:$0xff] %v2227
    %2276 = vst [vmem:[#allocation8 + $0x50] sm:$0xff] %v2228
    %2277 = vst [vmem:[#allocation8 + $0x58] sm:$0xff] %v2229
    %2278 = vst [vmem:[#allocation8 + $0x60] sm:$0xff] %v2230
    %2279 = vst [vmem:[#allocation8 + $0x68] sm:$0xff] %v2231
    %2280 = vst [vmem:[#allocation8 + $0x70] sm:$0xff] %v2232
    %2281 = vst [vmem:[#allocation8 + $0x78] sm:$0xff] %v2233
    %2282 = vst [vmem:[#allocation8 + $0x80] sm:$0xff] %v2234
    %2283 = vst [vmem:[#allocation8 + $0x88] sm:$0xff] %v2235
    %2284 = vst [vmem:[#allocation8 + $0x90] sm:$0xff] %v2236
    %2285 = vst [vmem:[#allocation8 + $0x98] sm:$0xff] %v2237
    %2286 = vst [vmem:[#allocation8 + $0xa0] sm:$0xff] %v2238
    %2287 = vst [vmem:[#allocation8 + $0xa8] sm:$0xff] %v2239
    %2288 = vst [vmem:[#allocation8 + $0xb0] sm:$0xff] %v2240
    %2289 = vst [vmem:[#allocation8 + $0xb8] sm:$0xff] %v2241
    %2290 = vst [vmem:[#allocation8 + $0xc0] sm:$0xff] %v2242
    %2291 = vst [vmem:[#allocation8 + $0xc8] sm:$0xff] %v2243
    %2292 = vst [vmem:[#allocation8 + $0xd0] sm:$0xff] %v2244
    %2293 = vst [vmem:[#allocation8 + $0xd8] sm:$0xff] %v2245
    %2294 = vst [vmem:[#allocation8 + $0xe0] sm:$0xff] %v2246
    %2295 = vst [vmem:[#allocation8 + $0xe8] sm:$0xff] %v2247
    %2296 = vst [vmem:[#allocation8 + $0xf0] sm:$0xff] %v2248
    %2297 = vst [vmem:[#allocation8 + $0xf8] sm:$0xff] %v2249
    %2298 = vst [vmem:[#allocation8 + $0x100] sm:$0xff] %v2250
    %2299 = vst [vmem:[#allocation8 + $0x108] sm:$0xff] %v2251
    %2300 = vst [vmem:[#allocation8 + $0x110] sm:$0xff] %v2252
    %2301 = vst [vmem:[#allocation8 + $0x118] sm:$0xff] %v2253
    %2302 = vst [vmem:[#allocation8 + $0x120] sm:$0xff] %v2254
    %2303 = vst [vmem:[#allocation8 + $0x128] sm:$0xff] %v2255
    %2304 = vst [vmem:[#allocation8 + $0x130] sm:$0xff] %v2256
    %2305 = vst [vmem:[#allocation8 + $0x138] sm:$0xff] %v2257
    %2306 = vst [vmem:[#allocation8 + $0x140] sm:$0xff] %v2258
    %2307 = vst [vmem:[#allocation8 + $0x148] sm:$0xff] %v2259
    %2308 = vst [vmem:[#allocation8 + $0x150] sm:$0xff] %v2260
    %2309 = vst [vmem:[#allocation8 + $0x158] sm:$0xff] %v2261
    %2310 = vst [vmem:[#allocation8 + $0x160] sm:$0xff] %v2262
    %2311 = vst [vmem:[#allocation8 + $0x168] sm:$0xff] %v2263
    %2312 = vst [vmem:[#allocation8 + $0x170] sm:$0xff] %v2264
    %2313 = vst [vmem:[#allocation8 + $0x178] sm:$0xff] %v2265
    // Predicated region
    $region30: #{tpu_custom_call.1} parent=1 // pred_check
      _
    $region31: #{tpu_custom_call.1} parent=1 // pred_check_branch
      %2315 = sbr.rel (0) target = $region33
    $region32: #{tpu_custom_call.1} parent=1 // pred_region
      %s2317 = ssub.s32 6144, 6144
      %2318 = vsyncadd [#allocation5], %s2317
      %s2319 = sshll.u32 [#allocation8], 4
      %s2320 = int_to_ptr.vmem [resolvable:$true] %s2319
      %2325 = dma.vmem_to_hbm [thread:$0]  %s2320, 6144, %s5, [#allocation5], 128, 128, 8
    $region33: #{tpu_custom_call.1} parent=1 // pred_fallthru
      _
    // Predicated region
    $region34: #{tpu_custom_call.1} parent=1 // pred_check
      _
    $region35: #{tpu_custom_call.1} parent=1 // pred_check_branch
      %2327 = sbr.rel (0) target = $region37
    $region36: #{tpu_custom_call.1} parent=1 // pred_region
      %2328 = dma.done [#allocation5], 6144
    $region37: #{tpu_custom_call.1} parent=1 // pred_fallthru
      _
    %2329 = vsyncpa [#allocation4], 1
    %2330 = vsyncpa [#allocation7], 1
    %2331 = vsyncpa [#allocation5], 1

</llo_original>
